<compile_context>
chip_gen: v7x
topology: tpu7x:2x2x1
jax: 0.10.0
libtpu: 0.0.40
codegen_flags: <defaults>
</compile_context>

<pallas_src>
import functools

import jax
import jax.numpy as jnp
import numpy as np
from jax.experimental import pallas as pl
from jax.experimental.pallas import tpu as pltpu


def _sub_net_fused_kernel(x_ref, *refs, num_layers):
    """Fused SUB_NET forward (VPU broadcast-FMA, bias folded into weights).

    refs (in order):
      x_ref               : (P, in0, Bblk)        input activations
      refs[:num_layers]   : w_aug_l = (P, out_l, in_l + 1)   [last column = bias]
      refs[-1]            : (P, 1, Bblk)           output
    """
    o_ref = refs[-1]
    w_refs = refs[:num_layers]

    P, _, b_blk = x_ref.shape
    x = x_ref[...].astype(jnp.float32)                    # (P, in_l, Bblk)

    for l in range(num_layers):                            # static unroll over layers
        w = w_refs[l][...].astype(jnp.float32)             # (P, out_l, in_l + 1)
        _, out_l, in_p1 = w.shape
        in_l = in_p1 - 1

        # Accumulator initialized from the folded-in bias column (lane broadcast once
        # per layer per block, no separate bias operand / DMA).
        y = jnp.broadcast_to(w[:, :, in_l:in_l + 1], (P, out_l, b_blk))

        # Pure-VPU contraction over the tiny `in` dim: each step is
        # (P,out,1) lane-broadcast * (P,1,B) sublane-broadcast FMA — no MXU, no XLU
        # transposes, p handled as extra vregs.
        for i in range(in_l):
            y = y + w[:, :, i:i + 1] * x[:, i:i + 1, :]

        if l < num_layers - 1:                             # hidden layers: ReLU
            y = jnp.maximum(y, 0.0)
        x = y

    o_ref[...] = x.astype(o_ref.dtype)


def _pick_block_b(b_pad, max_block=2048):
    """Choose the batch (lane) block.

    `b_pad` is a multiple of 128.  Returns a 128-multiple divisor of `b_pad` that is
    as large as possible (up to `max_block`) to amortize per-grid-step overhead, but
    capped at b_pad // 2 whenever b_pad >= 256 so the 'parallel' batch axis has >= 2
    steps and can be sharded across v7x's 2 TensorCores.
    """
    n_chunks = b_pad // 128
    if n_chunks <= 1:
        return b_pad
    cap_chunks = max(1, min(max_block, b_pad // 2) // 128)
    best = 1
    for d in range(1, cap_chunks + 1):
        if n_chunks % d == 0:
            best = d
    return best * 128


def sub_net_forward(params, out_params, x):
    """SUB_NET.forward (hidden NAM_linear + ReLU layers, then output NAM_linear)
    as a single fused pallas_call."""
    all_layers = list(params) + [out_params]
    num_layers = len(all_layers)
    P, in0, B = x.shape
    out_last = all_layers[-1][0].shape[1]                  # == 1 (output layer width)

    # Pad batch to a multiple of 128 -> lane-dense (unmasked) loads and stores.
    b_pad = max(128, ((B + 127) // 128) * 128)
    x_in = x
    if b_pad != B:
        x_in = jnp.pad(x, ((0, 0), (0, 0), (0, b_pad - B)))

    block_b = _pick_block_b(b_pad)
    assert b_pad % block_b == 0
    grid = (b_pad // block_b,)

    # Fold bias into the weight as a trailing column (one-time wrapper-side pack):
    # w_aug_l: (P, out_l, in_l + 1).  Weights are resident inside the kernel
    # (constant index_map), so no per-step relayout/DMA work for params beyond the
    # initial fill.
    w_augs = [jnp.concatenate([w, b], axis=-1) for (w, b) in all_layers]

    # Input activations: blocked along the (lane) batch axis only.
    in_specs = [pl.BlockSpec((P, in0, block_b), lambda j: (0, 0, j))]
    operands = [x_in]
    for w_aug in w_augs:
        p_, of, inf1 = w_aug.shape
        in_specs.append(pl.BlockSpec((p_, of, inf1), lambda j: (0, 0, 0)))
        operands.append(w_aug)

    out_specs = pl.BlockSpec((P, out_last, block_b), lambda j: (0, 0, j))

    kernel = functools.partial(_sub_net_fused_kernel, num_layers=num_layers)
    y = pl.pallas_call(
        kernel,
        out_shape=jax.ShapeDtypeStruct((P, out_last, b_pad), x.dtype),
        grid_spec=pltpu.PrefetchScalarGridSpec(
            num_scalar_prefetch=0,
            grid=grid,
            in_specs=in_specs,
            out_specs=out_specs,
        ),
        compiler_params=pltpu.CompilerParams(
            # Batch-block axis is embarrassingly parallel (sharded across TCs on v7x).
            dimension_semantics=("parallel",)),
    )(*operands)

    if b_pad != B:
        y = y[:, :, :B]
    return y


def init_nam_linear(key, pre_dims, in_features, out_features, dtype=jnp.float32):
    """Xavier-uniform weight, zero bias (matches NAM_linear.__init__/_init_xavier)."""
    val = np.sqrt(6.0 / (in_features + out_features))
    w_shape = tuple(pre_dims) + (out_features, in_features)
    b_shape = tuple(pre_dims) + (out_features, 1)
    w = jax.random.uniform(key, w_shape, dtype=dtype, minval=-val, maxval=val)
    b = jnp.zeros(b_shape, dtype=dtype)  # bias is NOT re-initialized in _init_xavier
    return w, b


def init_sub_net(key, pre_dims, dims, dtype=jnp.float32):
    """Parameters for SUB_NET(pre_dims, *dims): hidden layers + output (dims[-1] -> 1)."""
    params = []
    keys = jax.random.split(key, len(dims))
    for i in range(len(dims) - 1):
        params.append(init_nam_linear(keys[i], pre_dims, dims[i], dims[i + 1], dtype))
    out_params = init_nam_linear(keys[-1], pre_dims, dims[-1], 1, dtype)
    return params, out_params


def sub_net_forward_ref(params, out_params, x):
    """Pure-JAX reference (same math as the PyTorch module)."""
    for (w, b) in params:
        x = jnp.maximum(jnp.einsum("poi,pib->pob", w, x) + b, 0.0)
    w_o, b_o = out_params
    return jnp.einsum("poi,pib->pob", w_o, x) + b_o


if __name__ == "__main__":
    # P=4 sub-nets (pre_dims), hidden dims (8, 16, 16).
    P = 4
    dims = (8, 16, 16)

    key = jax.random.PRNGKey(0)
    k_param, k_x1, k_x2 = jax.random.split(key, 3)
    params, out_params = init_sub_net(k_param, (P,), dims)

    # Case 1: lane-dense batch (B = 128, single grid step).
    B1 = 128
    x1 = jax.random.normal(k_x1, (P, dims[0], B1), dtype=jnp.float32)
    y1 = jax.block_until_ready(sub_net_forward(params, out_params, x1))
    assert y1.shape == (P, 1, B1), y1.shape
    np.testing.assert_allclose(np.asarray(y1), np.asarray(sub_net_forward_ref(params, out_params, x1)),
                               rtol=1e-5, atol=1e-5)

    # Case 2: ragged batch (B = 200) -> exercises wrapper-side padding to 256 and a
    # 2-step 'parallel' grid (the v7x 2-TensorCore path).
    B2 = 200
    x2 = jax.random.normal(k_x2, (P, dims[0], B2), dtype=jnp.float32)
    y2 = jax.block_until_ready(sub_net_forward(params, out_params, x2))
    assert y2.shape == (P, 1, B2), y2.shape
    np.testing.assert_allclose(np.asarray(y2), np.asarray(sub_net_forward_ref(params, out_params, x2)),
                               rtol=1e-5, atol=1e-5)

    print("KERNEL_OK")
</pallas_src>

<mosaic_0001>
module attributes {stable_mosaic.version = 11 : i64} {
  func.func @_sub_net_fused_kernel(%arg0: i32, %arg1: memref<4x8x128xf32, #tpu.memory_space<vmem>>, %arg2: memref<4x16x9xf32, #tpu.memory_space<vmem>>, %arg3: memref<4x16x17xf32, #tpu.memory_space<vmem>>, %arg4: memref<4x1x17xf32, #tpu.memory_space<vmem>>, %arg5: memref<4x1x128xf32, #tpu.memory_space<vmem>>) attributes {dimension_semantics = [#tpu.dimension_semantics<parallel>], iteration_bounds = array<i64: 1>, scalar_prefetch = 0 : i64, scratch_operands = 0 : i64, tpu.core_type = #tpu.core_type<tc>, window_params = [{transform_indices = @transform_0, window_bounds = array<i64: 4, 8, 128>}, {pipeline_mode = #tpu.pipeline_mode<synchronous>, transform_indices = @transform_1, window_bounds = array<i64: 4, 16, 9>}, {pipeline_mode = #tpu.pipeline_mode<synchronous>, transform_indices = @transform_2, window_bounds = array<i64: 4, 16, 17>}, {pipeline_mode = #tpu.pipeline_mode<synchronous>, transform_indices = @transform_3, window_bounds = array<i64: 4, 1, 17>}, {transform_indices = @transform_4, window_bounds = array<i64: 4, 1, 128>}]} {
    %c0 = arith.constant 0 : index
    %c0_0 = arith.constant 0 : index
    %c0_1 = arith.constant 0 : index
    %0 = vector.load %arg1[%c0, %c0_0, %c0_1] : memref<4x8x128xf32, #tpu.memory_space<vmem>>, vector<4x8x128xf32>
    %c0_2 = arith.constant 0 : index
    %c0_3 = arith.constant 0 : index
    %c0_4 = arith.constant 0 : index
    %1 = vector.load %arg2[%c0_2, %c0_3, %c0_4] : memref<4x16x9xf32, #tpu.memory_space<vmem>>, vector<4x16x9xf32>
    %2 = vector.extract_strided_slice %1 {offsets = [0, 0, 8], sizes = [4, 16, 1], strides = [1, 1, 1]} : vector<4x16x9xf32> to vector<4x16x1xf32>
    %3 = vector.shape_cast %2 : vector<4x16x1xf32> to vector<4x16x1xf32>
    %4 = vector.broadcast %3 : vector<4x16x1xf32> to vector<4x16x128xf32>
    %5 = vector.extract_strided_slice %1 {offsets = [0, 0, 0], sizes = [4, 16, 1], strides = [1, 1, 1]} : vector<4x16x9xf32> to vector<4x16x1xf32>
    %6 = vector.extract_strided_slice %0 {offsets = [0, 0, 0], sizes = [4, 1, 128], strides = [1, 1, 1]} : vector<4x8x128xf32> to vector<4x1x128xf32>
    %7 = vector.broadcast %5 : vector<4x16x1xf32> to vector<4x16x128xf32>
    %8 = vector.broadcast %6 : vector<4x1x128xf32> to vector<4x16x128xf32>
    %9 = arith.mulf %7, %8 : vector<4x16x128xf32>
    %10 = arith.addf %4, %9 : vector<4x16x128xf32>
    %11 = vector.extract_strided_slice %1 {offsets = [0, 0, 1], sizes = [4, 16, 1], strides = [1, 1, 1]} : vector<4x16x9xf32> to vector<4x16x1xf32>
    %12 = vector.extract_strided_slice %0 {offsets = [0, 1, 0], sizes = [4, 1, 128], strides = [1, 1, 1]} : vector<4x8x128xf32> to vector<4x1x128xf32>
    %13 = vector.broadcast %11 : vector<4x16x1xf32> to vector<4x16x128xf32>
    %14 = vector.broadcast %12 : vector<4x1x128xf32> to vector<4x16x128xf32>
    %15 = arith.mulf %13, %14 : vector<4x16x128xf32>
    %16 = arith.addf %10, %15 : vector<4x16x128xf32>
    %17 = vector.extract_strided_slice %1 {offsets = [0, 0, 2], sizes = [4, 16, 1], strides = [1, 1, 1]} : vector<4x16x9xf32> to vector<4x16x1xf32>
    %18 = vector.extract_strided_slice %0 {offsets = [0, 2, 0], sizes = [4, 1, 128], strides = [1, 1, 1]} : vector<4x8x128xf32> to vector<4x1x128xf32>
    %19 = vector.broadcast %17 : vector<4x16x1xf32> to vector<4x16x128xf32>
    %20 = vector.broadcast %18 : vector<4x1x128xf32> to vector<4x16x128xf32>
    %21 = arith.mulf %19, %20 : vector<4x16x128xf32>
    %22 = arith.addf %16, %21 : vector<4x16x128xf32>
    %23 = vector.extract_strided_slice %1 {offsets = [0, 0, 3], sizes = [4, 16, 1], strides = [1, 1, 1]} : vector<4x16x9xf32> to vector<4x16x1xf32>
    %24 = vector.extract_strided_slice %0 {offsets = [0, 3, 0], sizes = [4, 1, 128], strides = [1, 1, 1]} : vector<4x8x128xf32> to vector<4x1x128xf32>
    %25 = vector.broadcast %23 : vector<4x16x1xf32> to vector<4x16x128xf32>
    %26 = vector.broadcast %24 : vector<4x1x128xf32> to vector<4x16x128xf32>
    %27 = arith.mulf %25, %26 : vector<4x16x128xf32>
    %28 = arith.addf %22, %27 : vector<4x16x128xf32>
    %29 = vector.extract_strided_slice %1 {offsets = [0, 0, 4], sizes = [4, 16, 1], strides = [1, 1, 1]} : vector<4x16x9xf32> to vector<4x16x1xf32>
    %30 = vector.extract_strided_slice %0 {offsets = [0, 4, 0], sizes = [4, 1, 128], strides = [1, 1, 1]} : vector<4x8x128xf32> to vector<4x1x128xf32>
    %31 = vector.broadcast %29 : vector<4x16x1xf32> to vector<4x16x128xf32>
    %32 = vector.broadcast %30 : vector<4x1x128xf32> to vector<4x16x128xf32>
    %33 = arith.mulf %31, %32 : vector<4x16x128xf32>
    %34 = arith.addf %28, %33 : vector<4x16x128xf32>
    %35 = vector.extract_strided_slice %1 {offsets = [0, 0, 5], sizes = [4, 16, 1], strides = [1, 1, 1]} : vector<4x16x9xf32> to vector<4x16x1xf32>
    %36 = vector.extract_strided_slice %0 {offsets = [0, 5, 0], sizes = [4, 1, 128], strides = [1, 1, 1]} : vector<4x8x128xf32> to vector<4x1x128xf32>
    %37 = vector.broadcast %35 : vector<4x16x1xf32> to vector<4x16x128xf32>
    %38 = vector.broadcast %36 : vector<4x1x128xf32> to vector<4x16x128xf32>
    %39 = arith.mulf %37, %38 : vector<4x16x128xf32>
    %40 = arith.addf %34, %39 : vector<4x16x128xf32>
    %41 = vector.extract_strided_slice %1 {offsets = [0, 0, 6], sizes = [4, 16, 1], strides = [1, 1, 1]} : vector<4x16x9xf32> to vector<4x16x1xf32>
    %42 = vector.extract_strided_slice %0 {offsets = [0, 6, 0], sizes = [4, 1, 128], strides = [1, 1, 1]} : vector<4x8x128xf32> to vector<4x1x128xf32>
    %43 = vector.broadcast %41 : vector<4x16x1xf32> to vector<4x16x128xf32>
    %44 = vector.broadcast %42 : vector<4x1x128xf32> to vector<4x16x128xf32>
    %45 = arith.mulf %43, %44 : vector<4x16x128xf32>
    %46 = arith.addf %40, %45 : vector<4x16x128xf32>
    %47 = vector.extract_strided_slice %1 {offsets = [0, 0, 7], sizes = [4, 16, 1], strides = [1, 1, 1]} : vector<4x16x9xf32> to vector<4x16x1xf32>
    %48 = vector.extract_strided_slice %0 {offsets = [0, 7, 0], sizes = [4, 1, 128], strides = [1, 1, 1]} : vector<4x8x128xf32> to vector<4x1x128xf32>
    %49 = vector.broadcast %47 : vector<4x16x1xf32> to vector<4x16x128xf32>
    %50 = vector.broadcast %48 : vector<4x1x128xf32> to vector<4x16x128xf32>
    %51 = arith.mulf %49, %50 : vector<4x16x128xf32>
    %52 = arith.addf %46, %51 : vector<4x16x128xf32>
    %cst = arith.constant 0.000000e+00 : f32
    %53 = vector.broadcast %cst : f32 to vector<4x16x128xf32>
    %54 = arith.maximumf %52, %53 : vector<4x16x128xf32>
    %c0_5 = arith.constant 0 : index
    %c0_6 = arith.constant 0 : index
    %c0_7 = arith.constant 0 : index
    %55 = vector.load %arg3[%c0_5, %c0_6, %c0_7] : memref<4x16x17xf32, #tpu.memory_space<vmem>>, vector<4x16x17xf32>
    %56 = vector.extract_strided_slice %55 {offsets = [0, 0, 16], sizes = [4, 16, 1], strides = [1, 1, 1]} : vector<4x16x17xf32> to vector<4x16x1xf32>
    %57 = vector.shape_cast %56 : vector<4x16x1xf32> to vector<4x16x1xf32>
    %58 = vector.broadcast %57 : vector<4x16x1xf32> to vector<4x16x128xf32>
    %59 = vector.extract_strided_slice %55 {offsets = [0, 0, 0], sizes = [4, 16, 1], strides = [1, 1, 1]} : vector<4x16x17xf32> to vector<4x16x1xf32>
    %60 = vector.extract_strided_slice %54 {offsets = [0, 0, 0], sizes = [4, 1, 128], strides = [1, 1, 1]} : vector<4x16x128xf32> to vector<4x1x128xf32>
    %61 = vector.broadcast %59 : vector<4x16x1xf32> to vector<4x16x128xf32>
    %62 = vector.broadcast %60 : vector<4x1x128xf32> to vector<4x16x128xf32>
    %63 = arith.mulf %61, %62 : vector<4x16x128xf32>
    %64 = arith.addf %58, %63 : vector<4x16x128xf32>
    %65 = vector.extract_strided_slice %55 {offsets = [0, 0, 1], sizes = [4, 16, 1], strides = [1, 1, 1]} : vector<4x16x17xf32> to vector<4x16x1xf32>
    %66 = vector.extract_strided_slice %54 {offsets = [0, 1, 0], sizes = [4, 1, 128], strides = [1, 1, 1]} : vector<4x16x128xf32> to vector<4x1x128xf32>
    %67 = vector.broadcast %65 : vector<4x16x1xf32> to vector<4x16x128xf32>
    %68 = vector.broadcast %66 : vector<4x1x128xf32> to vector<4x16x128xf32>
    %69 = arith.mulf %67, %68 : vector<4x16x128xf32>
    %70 = arith.addf %64, %69 : vector<4x16x128xf32>
    %71 = vector.extract_strided_slice %55 {offsets = [0, 0, 2], sizes = [4, 16, 1], strides = [1, 1, 1]} : vector<4x16x17xf32> to vector<4x16x1xf32>
    %72 = vector.extract_strided_slice %54 {offsets = [0, 2, 0], sizes = [4, 1, 128], strides = [1, 1, 1]} : vector<4x16x128xf32> to vector<4x1x128xf32>
    %73 = vector.broadcast %71 : vector<4x16x1xf32> to vector<4x16x128xf32>
    %74 = vector.broadcast %72 : vector<4x1x128xf32> to vector<4x16x128xf32>
    %75 = arith.mulf %73, %74 : vector<4x16x128xf32>
    %76 = arith.addf %70, %75 : vector<4x16x128xf32>
    %77 = vector.extract_strided_slice %55 {offsets = [0, 0, 3], sizes = [4, 16, 1], strides = [1, 1, 1]} : vector<4x16x17xf32> to vector<4x16x1xf32>
    %78 = vector.extract_strided_slice %54 {offsets = [0, 3, 0], sizes = [4, 1, 128], strides = [1, 1, 1]} : vector<4x16x128xf32> to vector<4x1x128xf32>
    %79 = vector.broadcast %77 : vector<4x16x1xf32> to vector<4x16x128xf32>
    %80 = vector.broadcast %78 : vector<4x1x128xf32> to vector<4x16x128xf32>
    %81 = arith.mulf %79, %80 : vector<4x16x128xf32>
    %82 = arith.addf %76, %81 : vector<4x16x128xf32>
    %83 = vector.extract_strided_slice %55 {offsets = [0, 0, 4], sizes = [4, 16, 1], strides = [1, 1, 1]} : vector<4x16x17xf32> to vector<4x16x1xf32>
    %84 = vector.extract_strided_slice %54 {offsets = [0, 4, 0], sizes = [4, 1, 128], strides = [1, 1, 1]} : vector<4x16x128xf32> to vector<4x1x128xf32>
    %85 = vector.broadcast %83 : vector<4x16x1xf32> to vector<4x16x128xf32>
    %86 = vector.broadcast %84 : vector<4x1x128xf32> to vector<4x16x128xf32>
    %87 = arith.mulf %85, %86 : vector<4x16x128xf32>
    %88 = arith.addf %82, %87 : vector<4x16x128xf32>
    %89 = vector.extract_strided_slice %55 {offsets = [0, 0, 5], sizes = [4, 16, 1], strides = [1, 1, 1]} : vector<4x16x17xf32> to vector<4x16x1xf32>
    %90 = vector.extract_strided_slice %54 {offsets = [0, 5, 0], sizes = [4, 1, 128], strides = [1, 1, 1]} : vector<4x16x128xf32> to vector<4x1x128xf32>
    %91 = vector.broadcast %89 : vector<4x16x1xf32> to vector<4x16x128xf32>
    %92 = vector.broadcast %90 : vector<4x1x128xf32> to vector<4x16x128xf32>
    %93 = arith.mulf %91, %92 : vector<4x16x128xf32>
    %94 = arith.addf %88, %93 : vector<4x16x128xf32>
    %95 = vector.extract_strided_slice %55 {offsets = [0, 0, 6], sizes = [4, 16, 1], strides = [1, 1, 1]} : vector<4x16x17xf32> to vector<4x16x1xf32>
    %96 = vector.extract_strided_slice %54 {offsets = [0, 6, 0], sizes = [4, 1, 128], strides = [1, 1, 1]} : vector<4x16x128xf32> to vector<4x1x128xf32>
    %97 = vector.broadcast %95 : vector<4x16x1xf32> to vector<4x16x128xf32>
    %98 = vector.broadcast %96 : vector<4x1x128xf32> to vector<4x16x128xf32>
    %99 = arith.mulf %97, %98 : vector<4x16x128xf32>
    %100 = arith.addf %94, %99 : vector<4x16x128xf32>
    %101 = vector.extract_strided_slice %55 {offsets = [0, 0, 7], sizes = [4, 16, 1], strides = [1, 1, 1]} : vector<4x16x17xf32> to vector<4x16x1xf32>
    %102 = vector.extract_strided_slice %54 {offsets = [0, 7, 0], sizes = [4, 1, 128], strides = [1, 1, 1]} : vector<4x16x128xf32> to vector<4x1x128xf32>
    %103 = vector.broadcast %101 : vector<4x16x1xf32> to vector<4x16x128xf32>
    %104 = vector.broadcast %102 : vector<4x1x128xf32> to vector<4x16x128xf32>
    %105 = arith.mulf %103, %104 : vector<4x16x128xf32>
    %106 = arith.addf %100, %105 : vector<4x16x128xf32>
    %107 = vector.extract_strided_slice %55 {offsets = [0, 0, 8], sizes = [4, 16, 1], strides = [1, 1, 1]} : vector<4x16x17xf32> to vector<4x16x1xf32>
    %108 = vector.extract_strided_slice %54 {offsets = [0, 8, 0], sizes = [4, 1, 128], strides = [1, 1, 1]} : vector<4x16x128xf32> to vector<4x1x128xf32>
    %109 = vector.broadcast %107 : vector<4x16x1xf32> to vector<4x16x128xf32>
    %110 = vector.broadcast %108 : vector<4x1x128xf32> to vector<4x16x128xf32>
    %111 = arith.mulf %109, %110 : vector<4x16x128xf32>
    %112 = arith.addf %106, %111 : vector<4x16x128xf32>
    %113 = vector.extract_strided_slice %55 {offsets = [0, 0, 9], sizes = [4, 16, 1], strides = [1, 1, 1]} : vector<4x16x17xf32> to vector<4x16x1xf32>
    %114 = vector.extract_strided_slice %54 {offsets = [0, 9, 0], sizes = [4, 1, 128], strides = [1, 1, 1]} : vector<4x16x128xf32> to vector<4x1x128xf32>
    %115 = vector.broadcast %113 : vector<4x16x1xf32> to vector<4x16x128xf32>
    %116 = vector.broadcast %114 : vector<4x1x128xf32> to vector<4x16x128xf32>
    %117 = arith.mulf %115, %116 : vector<4x16x128xf32>
    %118 = arith.addf %112, %117 : vector<4x16x128xf32>
    %119 = vector.extract_strided_slice %55 {offsets = [0, 0, 10], sizes = [4, 16, 1], strides = [1, 1, 1]} : vector<4x16x17xf32> to vector<4x16x1xf32>
    %120 = vector.extract_strided_slice %54 {offsets = [0, 10, 0], sizes = [4, 1, 128], strides = [1, 1, 1]} : vector<4x16x128xf32> to vector<4x1x128xf32>
    %121 = vector.broadcast %119 : vector<4x16x1xf32> to vector<4x16x128xf32>
    %122 = vector.broadcast %120 : vector<4x1x128xf32> to vector<4x16x128xf32>
    %123 = arith.mulf %121, %122 : vector<4x16x128xf32>
    %124 = arith.addf %118, %123 : vector<4x16x128xf32>
    %125 = vector.extract_strided_slice %55 {offsets = [0, 0, 11], sizes = [4, 16, 1], strides = [1, 1, 1]} : vector<4x16x17xf32> to vector<4x16x1xf32>
    %126 = vector.extract_strided_slice %54 {offsets = [0, 11, 0], sizes = [4, 1, 128], strides = [1, 1, 1]} : vector<4x16x128xf32> to vector<4x1x128xf32>
    %127 = vector.broadcast %125 : vector<4x16x1xf32> to vector<4x16x128xf32>
    %128 = vector.broadcast %126 : vector<4x1x128xf32> to vector<4x16x128xf32>
    %129 = arith.mulf %127, %128 : vector<4x16x128xf32>
    %130 = arith.addf %124, %129 : vector<4x16x128xf32>
    %131 = vector.extract_strided_slice %55 {offsets = [0, 0, 12], sizes = [4, 16, 1], strides = [1, 1, 1]} : vector<4x16x17xf32> to vector<4x16x1xf32>
    %132 = vector.extract_strided_slice %54 {offsets = [0, 12, 0], sizes = [4, 1, 128], strides = [1, 1, 1]} : vector<4x16x128xf32> to vector<4x1x128xf32>
    %133 = vector.broadcast %131 : vector<4x16x1xf32> to vector<4x16x128xf32>
    %134 = vector.broadcast %132 : vector<4x1x128xf32> to vector<4x16x128xf32>
    %135 = arith.mulf %133, %134 : vector<4x16x128xf32>
    %136 = arith.addf %130, %135 : vector<4x16x128xf32>
    %137 = vector.extract_strided_slice %55 {offsets = [0, 0, 13], sizes = [4, 16, 1], strides = [1, 1, 1]} : vector<4x16x17xf32> to vector<4x16x1xf32>
    %138 = vector.extract_strided_slice %54 {offsets = [0, 13, 0], sizes = [4, 1, 128], strides = [1, 1, 1]} : vector<4x16x128xf32> to vector<4x1x128xf32>
    %139 = vector.broadcast %137 : vector<4x16x1xf32> to vector<4x16x128xf32>
    %140 = vector.broadcast %138 : vector<4x1x128xf32> to vector<4x16x128xf32>
    %141 = arith.mulf %139, %140 : vector<4x16x128xf32>
    %142 = arith.addf %136, %141 : vector<4x16x128xf32>
    %143 = vector.extract_strided_slice %55 {offsets = [0, 0, 14], sizes = [4, 16, 1], strides = [1, 1, 1]} : vector<4x16x17xf32> to vector<4x16x1xf32>
    %144 = vector.extract_strided_slice %54 {offsets = [0, 14, 0], sizes = [4, 1, 128], strides = [1, 1, 1]} : vector<4x16x128xf32> to vector<4x1x128xf32>
    %145 = vector.broadcast %143 : vector<4x16x1xf32> to vector<4x16x128xf32>
    %146 = vector.broadcast %144 : vector<4x1x128xf32> to vector<4x16x128xf32>
    %147 = arith.mulf %145, %146 : vector<4x16x128xf32>
    %148 = arith.addf %142, %147 : vector<4x16x128xf32>
    %149 = vector.extract_strided_slice %55 {offsets = [0, 0, 15], sizes = [4, 16, 1], strides = [1, 1, 1]} : vector<4x16x17xf32> to vector<4x16x1xf32>
    %150 = vector.extract_strided_slice %54 {offsets = [0, 15, 0], sizes = [4, 1, 128], strides = [1, 1, 1]} : vector<4x16x128xf32> to vector<4x1x128xf32>
    %151 = vector.broadcast %149 : vector<4x16x1xf32> to vector<4x16x128xf32>
    %152 = vector.broadcast %150 : vector<4x1x128xf32> to vector<4x16x128xf32>
    %153 = arith.mulf %151, %152 : vector<4x16x128xf32>
    %154 = arith.addf %148, %153 : vector<4x16x128xf32>
    %cst_8 = arith.constant 0.000000e+00 : f32
    %155 = vector.broadcast %cst_8 : f32 to vector<4x16x128xf32>
    %156 = arith.maximumf %154, %155 : vector<4x16x128xf32>
    %c0_9 = arith.constant 0 : index
    %c0_10 = arith.constant 0 : index
    %c0_11 = arith.constant 0 : index
    %157 = vector.load %arg4[%c0_9, %c0_10, %c0_11] : memref<4x1x17xf32, #tpu.memory_space<vmem>>, vector<4x1x17xf32>
    %158 = vector.extract_strided_slice %157 {offsets = [0, 0, 16], sizes = [4, 1, 1], strides = [1, 1, 1]} : vector<4x1x17xf32> to vector<4x1x1xf32>
    %159 = vector.shape_cast %158 : vector<4x1x1xf32> to vector<4x1x1xf32>
    %160 = vector.broadcast %159 : vector<4x1x1xf32> to vector<4x1x128xf32>
    %161 = vector.extract_strided_slice %157 {offsets = [0, 0, 0], sizes = [4, 1, 1], strides = [1, 1, 1]} : vector<4x1x17xf32> to vector<4x1x1xf32>
    %162 = vector.extract_strided_slice %156 {offsets = [0, 0, 0], sizes = [4, 1, 128], strides = [1, 1, 1]} : vector<4x16x128xf32> to vector<4x1x128xf32>
    %163 = vector.broadcast %161 : vector<4x1x1xf32> to vector<4x1x128xf32>
    %164 = arith.mulf %163, %162 : vector<4x1x128xf32>
    %165 = arith.addf %160, %164 : vector<4x1x128xf32>
    %166 = vector.extract_strided_slice %157 {offsets = [0, 0, 1], sizes = [4, 1, 1], strides = [1, 1, 1]} : vector<4x1x17xf32> to vector<4x1x1xf32>
    %167 = vector.extract_strided_slice %156 {offsets = [0, 1, 0], sizes = [4, 1, 128], strides = [1, 1, 1]} : vector<4x16x128xf32> to vector<4x1x128xf32>
    %168 = vector.broadcast %166 : vector<4x1x1xf32> to vector<4x1x128xf32>
    %169 = arith.mulf %168, %167 : vector<4x1x128xf32>
    %170 = arith.addf %165, %169 : vector<4x1x128xf32>
    %171 = vector.extract_strided_slice %157 {offsets = [0, 0, 2], sizes = [4, 1, 1], strides = [1, 1, 1]} : vector<4x1x17xf32> to vector<4x1x1xf32>
    %172 = vector.extract_strided_slice %156 {offsets = [0, 2, 0], sizes = [4, 1, 128], strides = [1, 1, 1]} : vector<4x16x128xf32> to vector<4x1x128xf32>
    %173 = vector.broadcast %171 : vector<4x1x1xf32> to vector<4x1x128xf32>
    %174 = arith.mulf %173, %172 : vector<4x1x128xf32>
    %175 = arith.addf %170, %174 : vector<4x1x128xf32>
    %176 = vector.extract_strided_slice %157 {offsets = [0, 0, 3], sizes = [4, 1, 1], strides = [1, 1, 1]} : vector<4x1x17xf32> to vector<4x1x1xf32>
    %177 = vector.extract_strided_slice %156 {offsets = [0, 3, 0], sizes = [4, 1, 128], strides = [1, 1, 1]} : vector<4x16x128xf32> to vector<4x1x128xf32>
    %178 = vector.broadcast %176 : vector<4x1x1xf32> to vector<4x1x128xf32>
    %179 = arith.mulf %178, %177 : vector<4x1x128xf32>
    %180 = arith.addf %175, %179 : vector<4x1x128xf32>
    %181 = vector.extract_strided_slice %157 {offsets = [0, 0, 4], sizes = [4, 1, 1], strides = [1, 1, 1]} : vector<4x1x17xf32> to vector<4x1x1xf32>
    %182 = vector.extract_strided_slice %156 {offsets = [0, 4, 0], sizes = [4, 1, 128], strides = [1, 1, 1]} : vector<4x16x128xf32> to vector<4x1x128xf32>
    %183 = vector.broadcast %181 : vector<4x1x1xf32> to vector<4x1x128xf32>
    %184 = arith.mulf %183, %182 : vector<4x1x128xf32>
    %185 = arith.addf %180, %184 : vector<4x1x128xf32>
    %186 = vector.extract_strided_slice %157 {offsets = [0, 0, 5], sizes = [4, 1, 1], strides = [1, 1, 1]} : vector<4x1x17xf32> to vector<4x1x1xf32>
    %187 = vector.extract_strided_slice %156 {offsets = [0, 5, 0], sizes = [4, 1, 128], strides = [1, 1, 1]} : vector<4x16x128xf32> to vector<4x1x128xf32>
    %188 = vector.broadcast %186 : vector<4x1x1xf32> to vector<4x1x128xf32>
    %189 = arith.mulf %188, %187 : vector<4x1x128xf32>
    %190 = arith.addf %185, %189 : vector<4x1x128xf32>
    %191 = vector.extract_strided_slice %157 {offsets = [0, 0, 6], sizes = [4, 1, 1], strides = [1, 1, 1]} : vector<4x1x17xf32> to vector<4x1x1xf32>
    %192 = vector.extract_strided_slice %156 {offsets = [0, 6, 0], sizes = [4, 1, 128], strides = [1, 1, 1]} : vector<4x16x128xf32> to vector<4x1x128xf32>
    %193 = vector.broadcast %191 : vector<4x1x1xf32> to vector<4x1x128xf32>
    %194 = arith.mulf %193, %192 : vector<4x1x128xf32>
    %195 = arith.addf %190, %194 : vector<4x1x128xf32>
    %196 = vector.extract_strided_slice %157 {offsets = [0, 0, 7], sizes = [4, 1, 1], strides = [1, 1, 1]} : vector<4x1x17xf32> to vector<4x1x1xf32>
    %197 = vector.extract_strided_slice %156 {offsets = [0, 7, 0], sizes = [4, 1, 128], strides = [1, 1, 1]} : vector<4x16x128xf32> to vector<4x1x128xf32>
    %198 = vector.broadcast %196 : vector<4x1x1xf32> to vector<4x1x128xf32>
    %199 = arith.mulf %198, %197 : vector<4x1x128xf32>
    %200 = arith.addf %195, %199 : vector<4x1x128xf32>
    %201 = vector.extract_strided_slice %157 {offsets = [0, 0, 8], sizes = [4, 1, 1], strides = [1, 1, 1]} : vector<4x1x17xf32> to vector<4x1x1xf32>
    %202 = vector.extract_strided_slice %156 {offsets = [0, 8, 0], sizes = [4, 1, 128], strides = [1, 1, 1]} : vector<4x16x128xf32> to vector<4x1x128xf32>
    %203 = vector.broadcast %201 : vector<4x1x1xf32> to vector<4x1x128xf32>
    %204 = arith.mulf %203, %202 : vector<4x1x128xf32>
    %205 = arith.addf %200, %204 : vector<4x1x128xf32>
    %206 = vector.extract_strided_slice %157 {offsets = [0, 0, 9], sizes = [4, 1, 1], strides = [1, 1, 1]} : vector<4x1x17xf32> to vector<4x1x1xf32>
    %207 = vector.extract_strided_slice %156 {offsets = [0, 9, 0], sizes = [4, 1, 128], strides = [1, 1, 1]} : vector<4x16x128xf32> to vector<4x1x128xf32>
    %208 = vector.broadcast %206 : vector<4x1x1xf32> to vector<4x1x128xf32>
    %209 = arith.mulf %208, %207 : vector<4x1x128xf32>
    %210 = arith.addf %205, %209 : vector<4x1x128xf32>
    %211 = vector.extract_strided_slice %157 {offsets = [0, 0, 10], sizes = [4, 1, 1], strides = [1, 1, 1]} : vector<4x1x17xf32> to vector<4x1x1xf32>
    %212 = vector.extract_strided_slice %156 {offsets = [0, 10, 0], sizes = [4, 1, 128], strides = [1, 1, 1]} : vector<4x16x128xf32> to vector<4x1x128xf32>
    %213 = vector.broadcast %211 : vector<4x1x1xf32> to vector<4x1x128xf32>
    %214 = arith.mulf %213, %212 : vector<4x1x128xf32>
    %215 = arith.addf %210, %214 : vector<4x1x128xf32>
    %216 = vector.extract_strided_slice %157 {offsets = [0, 0, 11], sizes = [4, 1, 1], strides = [1, 1, 1]} : vector<4x1x17xf32> to vector<4x1x1xf32>
    %217 = vector.extract_strided_slice %156 {offsets = [0, 11, 0], sizes = [4, 1, 128], strides = [1, 1, 1]} : vector<4x16x128xf32> to vector<4x1x128xf32>
    %218 = vector.broadcast %216 : vector<4x1x1xf32> to vector<4x1x128xf32>
    %219 = arith.mulf %218, %217 : vector<4x1x128xf32>
    %220 = arith.addf %215, %219 : vector<4x1x128xf32>
    %221 = vector.extract_strided_slice %157 {offsets = [0, 0, 12], sizes = [4, 1, 1], strides = [1, 1, 1]} : vector<4x1x17xf32> to vector<4x1x1xf32>
    %222 = vector.extract_strided_slice %156 {offsets = [0, 12, 0], sizes = [4, 1, 128], strides = [1, 1, 1]} : vector<4x16x128xf32> to vector<4x1x128xf32>
    %223 = vector.broadcast %221 : vector<4x1x1xf32> to vector<4x1x128xf32>
    %224 = arith.mulf %223, %222 : vector<4x1x128xf32>
    %225 = arith.addf %220, %224 : vector<4x1x128xf32>
    %226 = vector.extract_strided_slice %157 {offsets = [0, 0, 13], sizes = [4, 1, 1], strides = [1, 1, 1]} : vector<4x1x17xf32> to vector<4x1x1xf32>
    %227 = vector.extract_strided_slice %156 {offsets = [0, 13, 0], sizes = [4, 1, 128], strides = [1, 1, 1]} : vector<4x16x128xf32> to vector<4x1x128xf32>
    %228 = vector.broadcast %226 : vector<4x1x1xf32> to vector<4x1x128xf32>
    %229 = arith.mulf %228, %227 : vector<4x1x128xf32>
    %230 = arith.addf %225, %229 : vector<4x1x128xf32>
    %231 = vector.extract_strided_slice %157 {offsets = [0, 0, 14], sizes = [4, 1, 1], strides = [1, 1, 1]} : vector<4x1x17xf32> to vector<4x1x1xf32>
    %232 = vector.extract_strided_slice %156 {offsets = [0, 14, 0], sizes = [4, 1, 128], strides = [1, 1, 1]} : vector<4x16x128xf32> to vector<4x1x128xf32>
    %233 = vector.broadcast %231 : vector<4x1x1xf32> to vector<4x1x128xf32>
    %234 = arith.mulf %233, %232 : vector<4x1x128xf32>
    %235 = arith.addf %230, %234 : vector<4x1x128xf32>
    %236 = vector.extract_strided_slice %157 {offsets = [0, 0, 15], sizes = [4, 1, 1], strides = [1, 1, 1]} : vector<4x1x17xf32> to vector<4x1x1xf32>
    %237 = vector.extract_strided_slice %156 {offsets = [0, 15, 0], sizes = [4, 1, 128], strides = [1, 1, 1]} : vector<4x16x128xf32> to vector<4x1x128xf32>
    %238 = vector.broadcast %236 : vector<4x1x1xf32> to vector<4x1x128xf32>
    %239 = arith.mulf %238, %237 : vector<4x1x128xf32>
    %240 = arith.addf %235, %239 : vector<4x1x128xf32>
    %c0_12 = arith.constant 0 : index
    %c0_13 = arith.constant 0 : index
    %c0_14 = arith.constant 0 : index
    %241 = vector.load %arg5[%c0_12, %c0_13, %c0_14] : memref<4x1x128xf32, #tpu.memory_space<vmem>>, vector<4x1x128xf32>
    tpu.vector_store %arg5[%c0_12, %c0_13, %c0_14], %240 {strides = array<i32>} : memref<4x1x128xf32, #tpu.memory_space<vmem>>, vector<4x1x128xf32>,
    return
  }
  func.func @transform_0(%arg0: i32) -> (i32, i32, i32) {
    %c0_i32 = arith.constant 0 : i32
    %c0_i32_0 = arith.constant 0 : i32
    %c0_i32_1 = arith.constant 0 : i32
    return %c0_i32, %c0_i32_0, %arg0 : i32, i32, i32
  }
  func.func @transform_1(%arg0: i32) -> (i32, i32, i32) {
    %c0_i32 = arith.constant 0 : i32
    %c0_i32_0 = arith.constant 0 : i32
    %c0_i32_1 = arith.constant 0 : i32
    %c0_i32_2 = arith.constant 0 : i32
    return %c0_i32, %c0_i32_0, %c0_i32_1 : i32, i32, i32
  }
  func.func @transform_2(%arg0: i32) -> (i32, i32, i32) {
    %c0_i32 = arith.constant 0 : i32
    %c0_i32_0 = arith.constant 0 : i32
    %c0_i32_1 = arith.constant 0 : i32
    %c0_i32_2 = arith.constant 0 : i32
    return %c0_i32, %c0_i32_0, %c0_i32_1 : i32, i32, i32
  }
  func.func @transform_3(%arg0: i32) -> (i32, i32, i32) {
    %c0_i32 = arith.constant 0 : i32
    %c0_i32_0 = arith.constant 0 : i32
    %c0_i32_1 = arith.constant 0 : i32
    %c0_i32_2 = arith.constant 0 : i32
    return %c0_i32, %c0_i32_0, %c0_i32_1 : i32, i32, i32
  }
  func.func @transform_4(%arg0: i32) -> (i32, i32, i32) {
    %c0_i32 = arith.constant 0 : i32
    %c0_i32_0 = arith.constant 0 : i32
    %c0_i32_1 = arith.constant 0 : i32
    return %c0_i32, %c0_i32_0, %arg0 : i32, i32, i32
  }
}

</mosaic_0001>

<llo_original>
// kernel: tpu_custom_call.1
$region0: #{tpu_custom_call.1}
  #allocation0 [shape = 'u32[]', space=smem, size = 0x4, offset = 0x4, fixed_abs, tag = 'smem constant byte address 0x4 - core index']
  #allocation1 [shape = 'u32[144,128]{1,0:T(1,128)}', space=vmem, size = 0x12000, scoped, tag = 'internal scratch']
  %s0 = inlined_call_operand.vmem [shape: f32[4,8,128], index: 0, kind: input, shape index: {}]
  %s1 = inlined_call_operand.vmem [shape: f32[4,16,9], index: 1, kind: input, shape index: {}]
  %s2 = inlined_call_operand.vmem [shape: f32[4,16,17], index: 2, kind: input, shape index: {}]
  %s3 = inlined_call_operand.vmem [shape: f32[4,1,17], index: 3, kind: input, shape index: {}]
  %s4 = inlined_call_operand.hbm [shape: f32[4,1,128], index: 4, kind: output, shape index: {}]
  %s5 = sld [smem:[#allocation0]]
  $region26: #{tpu_custom_call.1} parent=0
    _
  %s7 = ssub.s32 1, %s5
  %s8 = scalar_select 0, %s7, %s5
  $region1: #{tpu_custom_call.1} parent=0
    #allocation2 [shape = 'u8[2048]{0}', space=vmem, size = 0x800, scoped, tag = 'output window, operand 0, single buffered']
    #allocation3 [shape = 's32[1]{0}', space=sflag, size = 0x4, scoped, tag = 'scoped memory for tpu_custom_call.1']
    %9 = vsyncpa [#allocation3], 0
    // Predicated region
    $region2: #{tpu_custom_call.1} parent=1 // pred_check
      _
    $region3: #{tpu_custom_call.1} parent=1 // pred_check_branch
      %11 = sbr.rel (0) target = $region5
    $region4: #{tpu_custom_call.1} parent=1 // pred_region
      _
    $region5: #{tpu_custom_call.1} parent=1 // pred_fallthru
      _
    // Predicated region
    $region6: #{tpu_custom_call.1} parent=1 // pred_check
      _
    $region7: #{tpu_custom_call.1} parent=1 // pred_check_branch
      %13 = sbr.rel (0) target = $region9
    $region8: #{tpu_custom_call.1} parent=1 // pred_region
      _
    $region9: #{tpu_custom_call.1} parent=1 // pred_fallthru
      _
    // Predicated region
    $region10: #{tpu_custom_call.1} parent=1 // pred_check
      _
    $region11: #{tpu_custom_call.1} parent=1 // pred_check_branch
      %15 = sbr.rel (0) target = $region13
    $region12: #{tpu_custom_call.1} parent=1 // pred_region
      _
    $region13: #{tpu_custom_call.1} parent=1 // pred_fallthru
      _
    // Predicated region
    $region14: #{tpu_custom_call.1} parent=1 // pred_check
      _
    $region15: #{tpu_custom_call.1} parent=1 // pred_check_branch
      %17 = sbr.rel (0) target = $region17
    $region16: #{tpu_custom_call.1} parent=1 // pred_region
      _
    $region17: #{tpu_custom_call.1} parent=1 // pred_fallthru
      _
    %v18 = vld [vmem:[%s0] sm:$0xff]
    %v19 = vld [vmem:[%s0 + $0x8] sm:$0xff]
    %v20 = vld [vmem:[%s0 + $0x10] sm:$0xff]
    %v21 = vld [vmem:[%s0 + $0x18] sm:$0xff]
    %v22 = vld [vmem:[%s1] sm:$0xff]
    %v23 = vld [vmem:[%s1 + $0x8] sm:$0xff]
    %v24 = vld [vmem:[%s1 + $0x10] sm:$0xff]
    %v25 = vld [vmem:[%s1 + $0x18] sm:$0xff]
    %v26 = vld [vmem:[%s1 + $0x20] sm:$0xff]
    %v27 = vld [vmem:[%s1 + $0x28] sm:$0xff]
    %v28 = vld [vmem:[%s1 + $0x30] sm:$0xff]
    %v29 = vld [vmem:[%s1 + $0x38] sm:$0xff]
    %31 = vset.pattern.permute.xlu0 8
    %32 = vperm.xlu0 %31, %v22
    %v33 = vpop.permute.xlu0 %32
    %36 = vset.pattern.permute.xlu0 8
    %37 = vperm.xlu0 %36, %v23
    %v38 = vpop.permute.xlu0 %37
    %41 = vset.pattern.permute.xlu0 8
    %42 = vperm.xlu0 %41, %v24
    %v43 = vpop.permute.xlu0 %42
    %46 = vset.pattern.permute.xlu0 8
    %47 = vperm.xlu0 %46, %v25
    %v48 = vpop.permute.xlu0 %47
    %51 = vset.pattern.permute.xlu0 8
    %52 = vperm.xlu0 %51, %v26
    %v53 = vpop.permute.xlu0 %52
    %56 = vset.pattern.permute.xlu0 8
    %57 = vperm.xlu0 %56, %v27
    %v58 = vpop.permute.xlu0 %57
    %61 = vset.pattern.permute.xlu0 8
    %62 = vperm.xlu0 %61, %v28
    %v63 = vpop.permute.xlu0 %62
    %66 = vset.pattern.permute.xlu0 8
    %67 = vperm.xlu0 %66, %v29
    %v68 = vpop.permute.xlu0 %67
    %70 = vset.pattern.permute.xlu0 0
    %71 = vperm.xlu0 %70, %v22
    %v72 = vpop.permute.xlu0 %71
    %74 = vset.pattern.permute.xlu0 0
    %75 = vperm.xlu0 %74, %v23
    %v76 = vpop.permute.xlu0 %75
    %78 = vset.pattern.permute.xlu0 0
    %79 = vperm.xlu0 %78, %v24
    %v80 = vpop.permute.xlu0 %79
    %82 = vset.pattern.permute.xlu0 0
    %83 = vperm.xlu0 %82, %v25
    %v84 = vpop.permute.xlu0 %83
    %86 = vset.pattern.permute.xlu0 0
    %87 = vperm.xlu0 %86, %v26
    %v88 = vpop.permute.xlu0 %87
    %90 = vset.pattern.permute.xlu0 0
    %91 = vperm.xlu0 %90, %v27
    %v92 = vpop.permute.xlu0 %91
    %94 = vset.pattern.permute.xlu0 0
    %95 = vperm.xlu0 %94, %v28
    %v96 = vpop.permute.xlu0 %95
    %98 = vset.pattern.permute.xlu0 0
    %99 = vperm.xlu0 %98, %v29
    %v100 = vpop.permute.xlu0 %99
    %v102 = vlaneseq
    %v103 = vshrl.u32 %v102, 7
    %v104 = vsub.s32 0, %v103
    %v105 = vrot.slane %v18, %v104
    %v106 = vlaneseq
    %v107 = vshrl.u32 %v106, 7
    %v108 = vsub.s32 0, %v107
    %v109 = vrot.slane %v19, %v108
    %v110 = vlaneseq
    %v111 = vshrl.u32 %v110, 7
    %v112 = vsub.s32 0, %v111
    %v113 = vrot.slane %v20, %v112
    %v114 = vlaneseq
    %v115 = vshrl.u32 %v114, 7
    %v116 = vsub.s32 0, %v115
    %v117 = vrot.slane %v21, %v116
    %v118 = vmul.f32 %v72, %v105
    %v119 = vmul.f32 %v76, %v105
    %v120 = vmul.f32 %v80, %v109
    %v121 = vmul.f32 %v84, %v109
    %v122 = vmul.f32 %v88, %v113
    %v123 = vmul.f32 %v92, %v113
    %v124 = vmul.f32 %v96, %v117
    %v125 = vmul.f32 %v100, %v117
    %v126 = vadd.f32 %v33, %v118
    %v127 = vadd.f32 %v38, %v119
    %v128 = vadd.f32 %v43, %v120
    %v129 = vadd.f32 %v48, %v121
    %v130 = vadd.f32 %v53, %v122
    %v131 = vadd.f32 %v58, %v123
    %v132 = vadd.f32 %v63, %v124
    %v133 = vadd.f32 %v68, %v125
    %134 = vset.pattern.permute.xlu0 1
    %135 = vperm.xlu0 %134, %v22
    %v136 = vpop.permute.xlu0 %135
    %138 = vset.pattern.permute.xlu0 1
    %139 = vperm.xlu0 %138, %v23
    %v140 = vpop.permute.xlu0 %139
    %142 = vset.pattern.permute.xlu0 1
    %143 = vperm.xlu0 %142, %v24
    %v144 = vpop.permute.xlu0 %143
    %146 = vset.pattern.permute.xlu0 1
    %147 = vperm.xlu0 %146, %v25
    %v148 = vpop.permute.xlu0 %147
    %150 = vset.pattern.permute.xlu0 1
    %151 = vperm.xlu0 %150, %v26
    %v152 = vpop.permute.xlu0 %151
    %154 = vset.pattern.permute.xlu0 1
    %155 = vperm.xlu0 %154, %v27
    %v156 = vpop.permute.xlu0 %155
    %158 = vset.pattern.permute.xlu0 1
    %159 = vperm.xlu0 %158, %v28
    %v160 = vpop.permute.xlu0 %159
    %162 = vset.pattern.permute.xlu0 1
    %163 = vperm.xlu0 %162, %v29
    %v164 = vpop.permute.xlu0 %163
    %v166 = vlaneseq
    %v167 = vshrl.u32 %v166, 7
    %v168 = vsub.s32 1, %v167
    %v169 = vrot.slane %v18, %v168
    %v170 = vlaneseq
    %v171 = vshrl.u32 %v170, 7
    %v172 = vsub.s32 1, %v171
    %v173 = vrot.slane %v19, %v172
    %v174 = vlaneseq
    %v175 = vshrl.u32 %v174, 7
    %v176 = vsub.s32 1, %v175
    %v177 = vrot.slane %v20, %v176
    %v178 = vlaneseq
    %v179 = vshrl.u32 %v178, 7
    %v180 = vsub.s32 1, %v179
    %v181 = vrot.slane %v21, %v180
    %v182 = vmul.f32 %v136, %v169
    %v183 = vmul.f32 %v140, %v169
    %v184 = vmul.f32 %v144, %v173
    %v185 = vmul.f32 %v148, %v173
    %v186 = vmul.f32 %v152, %v177
    %v187 = vmul.f32 %v156, %v177
    %v188 = vmul.f32 %v160, %v181
    %v189 = vmul.f32 %v164, %v181
    %v190 = vadd.f32 %v126, %v182
    %v191 = vadd.f32 %v127, %v183
    %v192 = vadd.f32 %v128, %v184
    %v193 = vadd.f32 %v129, %v185
    %v194 = vadd.f32 %v130, %v186
    %v195 = vadd.f32 %v131, %v187
    %v196 = vadd.f32 %v132, %v188
    %v197 = vadd.f32 %v133, %v189
    %198 = vset.pattern.permute.xlu0 2
    %199 = vperm.xlu0 %198, %v22
    %v200 = vpop.permute.xlu0 %199
    %202 = vset.pattern.permute.xlu0 2
    %203 = vperm.xlu0 %202, %v23
    %v204 = vpop.permute.xlu0 %203
    %206 = vset.pattern.permute.xlu0 2
    %207 = vperm.xlu0 %206, %v24
    %v208 = vpop.permute.xlu0 %207
    %210 = vset.pattern.permute.xlu0 2
    %211 = vperm.xlu0 %210, %v25
    %v212 = vpop.permute.xlu0 %211
    %214 = vset.pattern.permute.xlu0 2
    %215 = vperm.xlu0 %214, %v26
    %v216 = vpop.permute.xlu0 %215
    %218 = vset.pattern.permute.xlu0 2
    %219 = vperm.xlu0 %218, %v27
    %v220 = vpop.permute.xlu0 %219
    %222 = vset.pattern.permute.xlu0 2
    %223 = vperm.xlu0 %222, %v28
    %v224 = vpop.permute.xlu0 %223
    %226 = vset.pattern.permute.xlu0 2
    %227 = vperm.xlu0 %226, %v29
    %v228 = vpop.permute.xlu0 %227
    %v230 = vlaneseq
    %v231 = vshrl.u32 %v230, 7
    %v232 = vsub.s32 2, %v231
    %v233 = vrot.slane %v18, %v232
    %v234 = vlaneseq
    %v235 = vshrl.u32 %v234, 7
    %v236 = vsub.s32 2, %v235
    %v237 = vrot.slane %v19, %v236
    %v238 = vlaneseq
    %v239 = vshrl.u32 %v238, 7
    %v240 = vsub.s32 2, %v239
    %v241 = vrot.slane %v20, %v240
    %v242 = vlaneseq
    %v243 = vshrl.u32 %v242, 7
    %v244 = vsub.s32 2, %v243
    %v245 = vrot.slane %v21, %v244
    %v246 = vmul.f32 %v200, %v233
    %v247 = vmul.f32 %v204, %v233
    %v248 = vmul.f32 %v208, %v237
    %v249 = vmul.f32 %v212, %v237
    %v250 = vmul.f32 %v216, %v241
    %v251 = vmul.f32 %v220, %v241
    %v252 = vmul.f32 %v224, %v245
    %v253 = vmul.f32 %v228, %v245
    %v254 = vadd.f32 %v190, %v246
    %v255 = vadd.f32 %v191, %v247
    %v256 = vadd.f32 %v192, %v248
    %v257 = vadd.f32 %v193, %v249
    %v258 = vadd.f32 %v194, %v250
    %v259 = vadd.f32 %v195, %v251
    %v260 = vadd.f32 %v196, %v252
    %v261 = vadd.f32 %v197, %v253
    %262 = vset.pattern.permute.xlu0 3
    %263 = vperm.xlu0 %262, %v22
    %v264 = vpop.permute.xlu0 %263
    %266 = vset.pattern.permute.xlu0 3
    %267 = vperm.xlu0 %266, %v23
    %v268 = vpop.permute.xlu0 %267
    %270 = vset.pattern.permute.xlu0 3
    %271 = vperm.xlu0 %270, %v24
    %v272 = vpop.permute.xlu0 %271
    %274 = vset.pattern.permute.xlu0 3
    %275 = vperm.xlu0 %274, %v25
    %v276 = vpop.permute.xlu0 %275
    %278 = vset.pattern.permute.xlu0 3
    %279 = vperm.xlu0 %278, %v26
    %v280 = vpop.permute.xlu0 %279
    %282 = vset.pattern.permute.xlu0 3
    %283 = vperm.xlu0 %282, %v27
    %v284 = vpop.permute.xlu0 %283
    %286 = vset.pattern.permute.xlu0 3
    %287 = vperm.xlu0 %286, %v28
    %v288 = vpop.permute.xlu0 %287
    %290 = vset.pattern.permute.xlu0 3
    %291 = vperm.xlu0 %290, %v29
    %v292 = vpop.permute.xlu0 %291
    %v294 = vlaneseq
    %v295 = vshrl.u32 %v294, 7
    %v296 = vsub.s32 3, %v295
    %v297 = vrot.slane %v18, %v296
    %v298 = vlaneseq
    %v299 = vshrl.u32 %v298, 7
    %v300 = vsub.s32 3, %v299
    %v301 = vrot.slane %v19, %v300
    %v302 = vlaneseq
    %v303 = vshrl.u32 %v302, 7
    %v304 = vsub.s32 3, %v303
    %v305 = vrot.slane %v20, %v304
    %v306 = vlaneseq
    %v307 = vshrl.u32 %v306, 7
    %v308 = vsub.s32 3, %v307
    %v309 = vrot.slane %v21, %v308
    %v310 = vmul.f32 %v264, %v297
    %v311 = vmul.f32 %v268, %v297
    %v312 = vmul.f32 %v272, %v301
    %v313 = vmul.f32 %v276, %v301
    %v314 = vmul.f32 %v280, %v305
    %v315 = vmul.f32 %v284, %v305
    %v316 = vmul.f32 %v288, %v309
    %v317 = vmul.f32 %v292, %v309
    %v318 = vadd.f32 %v254, %v310
    %v319 = vadd.f32 %v255, %v311
    %v320 = vadd.f32 %v256, %v312
    %v321 = vadd.f32 %v257, %v313
    %v322 = vadd.f32 %v258, %v314
    %v323 = vadd.f32 %v259, %v315
    %v324 = vadd.f32 %v260, %v316
    %v325 = vadd.f32 %v261, %v317
    %326 = vset.pattern.permute.xlu0 4
    %327 = vperm.xlu0 %326, %v22
    %v328 = vpop.permute.xlu0 %327
    %330 = vset.pattern.permute.xlu0 4
    %331 = vperm.xlu0 %330, %v23
    %v332 = vpop.permute.xlu0 %331
    %334 = vset.pattern.permute.xlu0 4
    %335 = vperm.xlu0 %334, %v24
    %v336 = vpop.permute.xlu0 %335
    %338 = vset.pattern.permute.xlu0 4
    %339 = vperm.xlu0 %338, %v25
    %v340 = vpop.permute.xlu0 %339
    %342 = vset.pattern.permute.xlu0 4
    %343 = vperm.xlu0 %342, %v26
    %v344 = vpop.permute.xlu0 %343
    %346 = vset.pattern.permute.xlu0 4
    %347 = vperm.xlu0 %346, %v27
    %v348 = vpop.permute.xlu0 %347
    %350 = vset.pattern.permute.xlu0 4
    %351 = vperm.xlu0 %350, %v28
    %v352 = vpop.permute.xlu0 %351
    %354 = vset.pattern.permute.xlu0 4
    %355 = vperm.xlu0 %354, %v29
    %v356 = vpop.permute.xlu0 %355
    %v358 = vlaneseq
    %v359 = vshrl.u32 %v358, 7
    %v360 = vsub.s32 4, %v359
    %v361 = vrot.slane %v18, %v360
    %v362 = vlaneseq
    %v363 = vshrl.u32 %v362, 7
    %v364 = vsub.s32 4, %v363
    %v365 = vrot.slane %v19, %v364
    %v366 = vlaneseq
    %v367 = vshrl.u32 %v366, 7
    %v368 = vsub.s32 4, %v367
    %v369 = vrot.slane %v20, %v368
    %v370 = vlaneseq
    %v371 = vshrl.u32 %v370, 7
    %v372 = vsub.s32 4, %v371
    %v373 = vrot.slane %v21, %v372
    %v374 = vmul.f32 %v328, %v361
    %v375 = vmul.f32 %v332, %v361
    %v376 = vmul.f32 %v336, %v365
    %v377 = vmul.f32 %v340, %v365
    %v378 = vmul.f32 %v344, %v369
    %v379 = vmul.f32 %v348, %v369
    %v380 = vmul.f32 %v352, %v373
    %v381 = vmul.f32 %v356, %v373
    %v382 = vadd.f32 %v318, %v374
    %v383 = vadd.f32 %v319, %v375
    %v384 = vadd.f32 %v320, %v376
    %v385 = vadd.f32 %v321, %v377
    %v386 = vadd.f32 %v322, %v378
    %v387 = vadd.f32 %v323, %v379
    %v388 = vadd.f32 %v324, %v380
    %v389 = vadd.f32 %v325, %v381
    %390 = vset.pattern.permute.xlu0 5
    %391 = vperm.xlu0 %390, %v22
    %v392 = vpop.permute.xlu0 %391
    %394 = vset.pattern.permute.xlu0 5
    %395 = vperm.xlu0 %394, %v23
    %v396 = vpop.permute.xlu0 %395
    %398 = vset.pattern.permute.xlu0 5
    %399 = vperm.xlu0 %398, %v24
    %v400 = vpop.permute.xlu0 %399
    %402 = vset.pattern.permute.xlu0 5
    %403 = vperm.xlu0 %402, %v25
    %v404 = vpop.permute.xlu0 %403
    %406 = vset.pattern.permute.xlu0 5
    %407 = vperm.xlu0 %406, %v26
    %v408 = vpop.permute.xlu0 %407
    %410 = vset.pattern.permute.xlu0 5
    %411 = vperm.xlu0 %410, %v27
    %v412 = vpop.permute.xlu0 %411
    %414 = vset.pattern.permute.xlu0 5
    %415 = vperm.xlu0 %414, %v28
    %v416 = vpop.permute.xlu0 %415
    %418 = vset.pattern.permute.xlu0 5
    %419 = vperm.xlu0 %418, %v29
    %v420 = vpop.permute.xlu0 %419
    %v422 = vlaneseq
    %v423 = vshrl.u32 %v422, 7
    %v424 = vsub.s32 5, %v423
    %v425 = vrot.slane %v18, %v424
    %v426 = vlaneseq
    %v427 = vshrl.u32 %v426, 7
    %v428 = vsub.s32 5, %v427
    %v429 = vrot.slane %v19, %v428
    %v430 = vlaneseq
    %v431 = vshrl.u32 %v430, 7
    %v432 = vsub.s32 5, %v431
    %v433 = vrot.slane %v20, %v432
    %v434 = vlaneseq
    %v435 = vshrl.u32 %v434, 7
    %v436 = vsub.s32 5, %v435
    %v437 = vrot.slane %v21, %v436
    %v438 = vmul.f32 %v392, %v425
    %v439 = vmul.f32 %v396, %v425
    %v440 = vmul.f32 %v400, %v429
    %v441 = vmul.f32 %v404, %v429
    %v442 = vmul.f32 %v408, %v433
    %v443 = vmul.f32 %v412, %v433
    %v444 = vmul.f32 %v416, %v437
    %v445 = vmul.f32 %v420, %v437
    %v446 = vadd.f32 %v382, %v438
    %v447 = vadd.f32 %v383, %v439
    %v448 = vadd.f32 %v384, %v440
    %v449 = vadd.f32 %v385, %v441
    %v450 = vadd.f32 %v386, %v442
    %v451 = vadd.f32 %v387, %v443
    %v452 = vadd.f32 %v388, %v444
    %v453 = vadd.f32 %v389, %v445
    %454 = vset.pattern.permute.xlu0 6
    %455 = vperm.xlu0 %454, %v22
    %v456 = vpop.permute.xlu0 %455
    %458 = vset.pattern.permute.xlu0 6
    %459 = vperm.xlu0 %458, %v23
    %v460 = vpop.permute.xlu0 %459
    %462 = vset.pattern.permute.xlu0 6
    %463 = vperm.xlu0 %462, %v24
    %v464 = vpop.permute.xlu0 %463
    %466 = vset.pattern.permute.xlu0 6
    %467 = vperm.xlu0 %466, %v25
    %v468 = vpop.permute.xlu0 %467
    %470 = vset.pattern.permute.xlu0 6
    %471 = vperm.xlu0 %470, %v26
    %v472 = vpop.permute.xlu0 %471
    %474 = vset.pattern.permute.xlu0 6
    %475 = vperm.xlu0 %474, %v27
    %v476 = vpop.permute.xlu0 %475
    %478 = vset.pattern.permute.xlu0 6
    %479 = vperm.xlu0 %478, %v28
    %v480 = vpop.permute.xlu0 %479
    %482 = vset.pattern.permute.xlu0 6
    %483 = vperm.xlu0 %482, %v29
    %v484 = vpop.permute.xlu0 %483
    %v486 = vlaneseq
    %v487 = vshrl.u32 %v486, 7
    %v488 = vsub.s32 6, %v487
    %v489 = vrot.slane %v18, %v488
    %v490 = vlaneseq
    %v491 = vshrl.u32 %v490, 7
    %v492 = vsub.s32 6, %v491
    %v493 = vrot.slane %v19, %v492
    %v494 = vlaneseq
    %v495 = vshrl.u32 %v494, 7
    %v496 = vsub.s32 6, %v495
    %v497 = vrot.slane %v20, %v496
    %v498 = vlaneseq
    %v499 = vshrl.u32 %v498, 7
    %v500 = vsub.s32 6, %v499
    %v501 = vrot.slane %v21, %v500
    %v502 = vmul.f32 %v456, %v489
    %v503 = vmul.f32 %v460, %v489
    %v504 = vmul.f32 %v464, %v493
    %v505 = vmul.f32 %v468, %v493
    %v506 = vmul.f32 %v472, %v497
    %v507 = vmul.f32 %v476, %v497
    %v508 = vmul.f32 %v480, %v501
    %v509 = vmul.f32 %v484, %v501
    %v510 = vadd.f32 %v446, %v502
    %v511 = vadd.f32 %v447, %v503
    %v512 = vadd.f32 %v448, %v504
    %v513 = vadd.f32 %v449, %v505
    %v514 = vadd.f32 %v450, %v506
    %v515 = vadd.f32 %v451, %v507
    %v516 = vadd.f32 %v452, %v508
    %v517 = vadd.f32 %v453, %v509
    %518 = vset.pattern.permute.xlu0 7
    %519 = vperm.xlu0 %518, %v22
    %v520 = vpop.permute.xlu0 %519
    %522 = vset.pattern.permute.xlu0 7
    %523 = vperm.xlu0 %522, %v23
    %v524 = vpop.permute.xlu0 %523
    %526 = vset.pattern.permute.xlu0 7
    %527 = vperm.xlu0 %526, %v24
    %v528 = vpop.permute.xlu0 %527
    %530 = vset.pattern.permute.xlu0 7
    %531 = vperm.xlu0 %530, %v25
    %v532 = vpop.permute.xlu0 %531
    %534 = vset.pattern.permute.xlu0 7
    %535 = vperm.xlu0 %534, %v26
    %v536 = vpop.permute.xlu0 %535
    %538 = vset.pattern.permute.xlu0 7
    %539 = vperm.xlu0 %538, %v27
    %v540 = vpop.permute.xlu0 %539
    %542 = vset.pattern.permute.xlu0 7
    %543 = vperm.xlu0 %542, %v28
    %v544 = vpop.permute.xlu0 %543
    %546 = vset.pattern.permute.xlu0 7
    %547 = vperm.xlu0 %546, %v29
    %v548 = vpop.permute.xlu0 %547
    %v550 = vlaneseq
    %v551 = vshrl.u32 %v550, 7
    %v552 = vsub.s32 7, %v551
    %v553 = vrot.slane %v18, %v552
    %v554 = vlaneseq
    %v555 = vshrl.u32 %v554, 7
    %v556 = vsub.s32 7, %v555
    %v557 = vrot.slane %v19, %v556
    %v558 = vlaneseq
    %v559 = vshrl.u32 %v558, 7
    %v560 = vsub.s32 7, %v559
    %v561 = vrot.slane %v20, %v560
    %v562 = vlaneseq
    %v563 = vshrl.u32 %v562, 7
    %v564 = vsub.s32 7, %v563
    %v565 = vrot.slane %v21, %v564
    %v566 = vmul.f32 %v520, %v553
    %v567 = vmul.f32 %v524, %v553
    %v568 = vmul.f32 %v528, %v557
    %v569 = vmul.f32 %v532, %v557
    %v570 = vmul.f32 %v536, %v561
    %v571 = vmul.f32 %v540, %v561
    %v572 = vmul.f32 %v544, %v565
    %v573 = vmul.f32 %v548, %v565
    %v574 = vadd.f32 %v510, %v566
    %v575 = vadd.f32 %v511, %v567
    %v576 = vadd.f32 %v512, %v568
    %v577 = vadd.f32 %v513, %v569
    %v578 = vadd.f32 %v514, %v570
    %v579 = vadd.f32 %v515, %v571
    %v580 = vadd.f32 %v516, %v572
    %v581 = vadd.f32 %v517, %v573
    %v582 = vmax.f32 %v574, 0.0
    %v583 = vmax.f32 %v575, 0.0
    %v584 = vmax.f32 %v576, 0.0
    %v585 = vmax.f32 %v577, 0.0
    %v586 = vmax.f32 %v578, 0.0
    %v587 = vmax.f32 %v579, 0.0
    %v588 = vmax.f32 %v580, 0.0
    %v589 = vmax.f32 %v581, 0.0
    %v590 = vld [vmem:[%s2] sm:$0xff]
    %v591 = vld [vmem:[%s2 + $0x8] sm:$0xff]
    %v592 = vld [vmem:[%s2 + $0x10] sm:$0xff]
    %v593 = vld [vmem:[%s2 + $0x18] sm:$0xff]
    %v594 = vld [vmem:[%s2 + $0x20] sm:$0xff]
    %v595 = vld [vmem:[%s2 + $0x28] sm:$0xff]
    %v596 = vld [vmem:[%s2 + $0x30] sm:$0xff]
    %v597 = vld [vmem:[%s2 + $0x38] sm:$0xff]
    %599 = vset.pattern.permute.xlu0 16
    %600 = vperm.xlu0 %599, %v590
    %v601 = vpop.permute.xlu0 %600
    %604 = vset.pattern.permute.xlu0 16
    %605 = vperm.xlu0 %604, %v591
    %v606 = vpop.permute.xlu0 %605
    %609 = vset.pattern.permute.xlu0 16
    %610 = vperm.xlu0 %609, %v592
    %v611 = vpop.permute.xlu0 %610
    %614 = vset.pattern.permute.xlu0 16
    %615 = vperm.xlu0 %614, %v593
    %v616 = vpop.permute.xlu0 %615
    %619 = vset.pattern.permute.xlu0 16
    %620 = vperm.xlu0 %619, %v594
    %v621 = vpop.permute.xlu0 %620
    %624 = vset.pattern.permute.xlu0 16
    %625 = vperm.xlu0 %624, %v595
    %v626 = vpop.permute.xlu0 %625
    %629 = vset.pattern.permute.xlu0 16
    %630 = vperm.xlu0 %629, %v596
    %v631 = vpop.permute.xlu0 %630
    %634 = vset.pattern.permute.xlu0 16
    %635 = vperm.xlu0 %634, %v597
    %v636 = vpop.permute.xlu0 %635
    %638 = vset.pattern.permute.xlu0 0
    %639 = vperm.xlu0 %638, %v590
    %v640 = vpop.permute.xlu0 %639
    %642 = vset.pattern.permute.xlu0 0
    %643 = vperm.xlu0 %642, %v591
    %v644 = vpop.permute.xlu0 %643
    %646 = vset.pattern.permute.xlu0 0
    %647 = vperm.xlu0 %646, %v592
    %v648 = vpop.permute.xlu0 %647
    %650 = vset.pattern.permute.xlu0 0
    %651 = vperm.xlu0 %650, %v593
    %v652 = vpop.permute.xlu0 %651
    %654 = vset.pattern.permute.xlu0 0
    %655 = vperm.xlu0 %654, %v594
    %v656 = vpop.permute.xlu0 %655
    %658 = vset.pattern.permute.xlu0 0
    %659 = vperm.xlu0 %658, %v595
    %v660 = vpop.permute.xlu0 %659
    %662 = vset.pattern.permute.xlu0 0
    %663 = vperm.xlu0 %662, %v596
    %v664 = vpop.permute.xlu0 %663
    %666 = vset.pattern.permute.xlu0 0
    %667 = vperm.xlu0 %666, %v597
    %v668 = vpop.permute.xlu0 %667
    %v670 = vlaneseq
    %v671 = vshrl.u32 %v670, 7
    %v672 = vsub.s32 0, %v671
    %v673 = vrot.slane %v582, %v672
    %v674 = vlaneseq
    %v675 = vshrl.u32 %v674, 7
    %v676 = vsub.s32 0, %v675
    %v677 = vrot.slane %v584, %v676
    %v678 = vlaneseq
    %v679 = vshrl.u32 %v678, 7
    %v680 = vsub.s32 0, %v679
    %v681 = vrot.slane %v586, %v680
    %v682 = vlaneseq
    %v683 = vshrl.u32 %v682, 7
    %v684 = vsub.s32 0, %v683
    %v685 = vrot.slane %v588, %v684
    %v686 = vmul.f32 %v640, %v673
    %v687 = vmul.f32 %v644, %v673
    %v688 = vmul.f32 %v648, %v677
    %v689 = vmul.f32 %v652, %v677
    %v690 = vmul.f32 %v656, %v681
    %v691 = vmul.f32 %v660, %v681
    %v692 = vmul.f32 %v664, %v685
    %v693 = vmul.f32 %v668, %v685
    %v694 = vadd.f32 %v601, %v686
    %v695 = vadd.f32 %v606, %v687
    %v696 = vadd.f32 %v611, %v688
    %v697 = vadd.f32 %v616, %v689
    %v698 = vadd.f32 %v621, %v690
    %v699 = vadd.f32 %v626, %v691
    %v700 = vadd.f32 %v631, %v692
    %v701 = vadd.f32 %v636, %v693
    %702 = vset.pattern.permute.xlu0 1
    %703 = vperm.xlu0 %702, %v590
    %v704 = vpop.permute.xlu0 %703
    %706 = vset.pattern.permute.xlu0 1
    %707 = vperm.xlu0 %706, %v591
    %v708 = vpop.permute.xlu0 %707
    %710 = vset.pattern.permute.xlu0 1
    %711 = vperm.xlu0 %710, %v592
    %v712 = vpop.permute.xlu0 %711
    %714 = vset.pattern.permute.xlu0 1
    %715 = vperm.xlu0 %714, %v593
    %v716 = vpop.permute.xlu0 %715
    %718 = vset.pattern.permute.xlu0 1
    %719 = vperm.xlu0 %718, %v594
    %v720 = vpop.permute.xlu0 %719
    %722 = vset.pattern.permute.xlu0 1
    %723 = vperm.xlu0 %722, %v595
    %v724 = vpop.permute.xlu0 %723
    %726 = vset.pattern.permute.xlu0 1
    %727 = vperm.xlu0 %726, %v596
    %v728 = vpop.permute.xlu0 %727
    %730 = vset.pattern.permute.xlu0 1
    %731 = vperm.xlu0 %730, %v597
    %v732 = vpop.permute.xlu0 %731
    %v734 = vlaneseq
    %v735 = vshrl.u32 %v734, 7
    %v736 = vsub.s32 1, %v735
    %v737 = vrot.slane %v582, %v736
    %v738 = vlaneseq
    %v739 = vshrl.u32 %v738, 7
    %v740 = vsub.s32 1, %v739
    %v741 = vrot.slane %v584, %v740
    %v742 = vlaneseq
    %v743 = vshrl.u32 %v742, 7
    %v744 = vsub.s32 1, %v743
    %v745 = vrot.slane %v586, %v744
    %v746 = vlaneseq
    %v747 = vshrl.u32 %v746, 7
    %v748 = vsub.s32 1, %v747
    %v749 = vrot.slane %v588, %v748
    %v750 = vmul.f32 %v704, %v737
    %v751 = vmul.f32 %v708, %v737
    %v752 = vmul.f32 %v712, %v741
    %v753 = vmul.f32 %v716, %v741
    %v754 = vmul.f32 %v720, %v745
    %v755 = vmul.f32 %v724, %v745
    %v756 = vmul.f32 %v728, %v749
    %v757 = vmul.f32 %v732, %v749
    %v758 = vadd.f32 %v694, %v750
    %v759 = vadd.f32 %v695, %v751
    %v760 = vadd.f32 %v696, %v752
    %v761 = vadd.f32 %v697, %v753
    %v762 = vadd.f32 %v698, %v754
    %v763 = vadd.f32 %v699, %v755
    %v764 = vadd.f32 %v700, %v756
    %v765 = vadd.f32 %v701, %v757
    %766 = vset.pattern.permute.xlu0 2
    %767 = vperm.xlu0 %766, %v590
    %v768 = vpop.permute.xlu0 %767
    %770 = vset.pattern.permute.xlu0 2
    %771 = vperm.xlu0 %770, %v591
    %v772 = vpop.permute.xlu0 %771
    %774 = vset.pattern.permute.xlu0 2
    %775 = vperm.xlu0 %774, %v592
    %v776 = vpop.permute.xlu0 %775
    %778 = vset.pattern.permute.xlu0 2
    %779 = vperm.xlu0 %778, %v593
    %v780 = vpop.permute.xlu0 %779
    %782 = vset.pattern.permute.xlu0 2
    %783 = vperm.xlu0 %782, %v594
    %v784 = vpop.permute.xlu0 %783
    %786 = vset.pattern.permute.xlu0 2
    %787 = vperm.xlu0 %786, %v595
    %v788 = vpop.permute.xlu0 %787
    %790 = vset.pattern.permute.xlu0 2
    %791 = vperm.xlu0 %790, %v596
    %v792 = vpop.permute.xlu0 %791
    %794 = vset.pattern.permute.xlu0 2
    %795 = vperm.xlu0 %794, %v597
    %v796 = vpop.permute.xlu0 %795
    %v798 = vlaneseq
    %v799 = vshrl.u32 %v798, 7
    %v800 = vsub.s32 2, %v799
    %v801 = vrot.slane %v582, %v800
    %v802 = vlaneseq
    %v803 = vshrl.u32 %v802, 7
    %v804 = vsub.s32 2, %v803
    %v805 = vrot.slane %v584, %v804
    %v806 = vlaneseq
    %v807 = vshrl.u32 %v806, 7
    %v808 = vsub.s32 2, %v807
    %v809 = vrot.slane %v586, %v808
    %v810 = vlaneseq
    %v811 = vshrl.u32 %v810, 7
    %v812 = vsub.s32 2, %v811
    %v813 = vrot.slane %v588, %v812
    %v814 = vmul.f32 %v768, %v801
    %v815 = vmul.f32 %v772, %v801
    %v816 = vmul.f32 %v776, %v805
    %v817 = vmul.f32 %v780, %v805
    %v818 = vmul.f32 %v784, %v809
    %v819 = vmul.f32 %v788, %v809
    %v820 = vmul.f32 %v792, %v813
    %v821 = vmul.f32 %v796, %v813
    %v822 = vadd.f32 %v758, %v814
    %v823 = vadd.f32 %v759, %v815
    %v824 = vadd.f32 %v760, %v816
    %v825 = vadd.f32 %v761, %v817
    %v826 = vadd.f32 %v762, %v818
    %v827 = vadd.f32 %v763, %v819
    %v828 = vadd.f32 %v764, %v820
    %v829 = vadd.f32 %v765, %v821
    %830 = vset.pattern.permute.xlu0 3
    %831 = vperm.xlu0 %830, %v590
    %v832 = vpop.permute.xlu0 %831
    %834 = vset.pattern.permute.xlu0 3
    %835 = vperm.xlu0 %834, %v591
    %v836 = vpop.permute.xlu0 %835
    %838 = vset.pattern.permute.xlu0 3
    %839 = vperm.xlu0 %838, %v592
    %v840 = vpop.permute.xlu0 %839
    %842 = vset.pattern.permute.xlu0 3
    %843 = vperm.xlu0 %842, %v593
    %v844 = vpop.permute.xlu0 %843
    %846 = vset.pattern.permute.xlu0 3
    %847 = vperm.xlu0 %846, %v594
    %v848 = vpop.permute.xlu0 %847
    %850 = vset.pattern.permute.xlu0 3
    %851 = vperm.xlu0 %850, %v595
    %v852 = vpop.permute.xlu0 %851
    %854 = vset.pattern.permute.xlu0 3
    %855 = vperm.xlu0 %854, %v596
    %v856 = vpop.permute.xlu0 %855
    %858 = vset.pattern.permute.xlu0 3
    %859 = vperm.xlu0 %858, %v597
    %v860 = vpop.permute.xlu0 %859
    %v862 = vlaneseq
    %v863 = vshrl.u32 %v862, 7
    %v864 = vsub.s32 3, %v863
    %v865 = vrot.slane %v582, %v864
    %v866 = vlaneseq
    %v867 = vshrl.u32 %v866, 7
    %v868 = vsub.s32 3, %v867
    %v869 = vrot.slane %v584, %v868
    %v870 = vlaneseq
    %v871 = vshrl.u32 %v870, 7
    %v872 = vsub.s32 3, %v871
    %v873 = vrot.slane %v586, %v872
    %v874 = vlaneseq
    %v875 = vshrl.u32 %v874, 7
    %v876 = vsub.s32 3, %v875
    %v877 = vrot.slane %v588, %v876
    %v878 = vmul.f32 %v832, %v865
    %v879 = vmul.f32 %v836, %v865
    %v880 = vmul.f32 %v840, %v869
    %v881 = vmul.f32 %v844, %v869
    %v882 = vmul.f32 %v848, %v873
    %v883 = vmul.f32 %v852, %v873
    %v884 = vmul.f32 %v856, %v877
    %v885 = vmul.f32 %v860, %v877
    %v886 = vadd.f32 %v822, %v878
    %v887 = vadd.f32 %v823, %v879
    %v888 = vadd.f32 %v824, %v880
    %v889 = vadd.f32 %v825, %v881
    %v890 = vadd.f32 %v826, %v882
    %v891 = vadd.f32 %v827, %v883
    %v892 = vadd.f32 %v828, %v884
    %v893 = vadd.f32 %v829, %v885
    %894 = vset.pattern.permute.xlu0 4
    %895 = vperm.xlu0 %894, %v590
    %v896 = vpop.permute.xlu0 %895
    %898 = vset.pattern.permute.xlu0 4
    %899 = vperm.xlu0 %898, %v591
    %v900 = vpop.permute.xlu0 %899
    %902 = vset.pattern.permute.xlu0 4
    %903 = vperm.xlu0 %902, %v592
    %v904 = vpop.permute.xlu0 %903
    %906 = vset.pattern.permute.xlu0 4
    %907 = vperm.xlu0 %906, %v593
    %v908 = vpop.permute.xlu0 %907
    %910 = vset.pattern.permute.xlu0 4
    %911 = vperm.xlu0 %910, %v594
    %v912 = vpop.permute.xlu0 %911
    %914 = vset.pattern.permute.xlu0 4
    %915 = vperm.xlu0 %914, %v595
    %v916 = vpop.permute.xlu0 %915
    %918 = vset.pattern.permute.xlu0 4
    %919 = vperm.xlu0 %918, %v596
    %v920 = vpop.permute.xlu0 %919
    %922 = vset.pattern.permute.xlu0 4
    %923 = vperm.xlu0 %922, %v597
    %v924 = vpop.permute.xlu0 %923
    %v926 = vlaneseq
    %v927 = vshrl.u32 %v926, 7
    %v928 = vsub.s32 4, %v927
    %v929 = vrot.slane %v582, %v928
    %v930 = vlaneseq
    %v931 = vshrl.u32 %v930, 7
    %v932 = vsub.s32 4, %v931
    %v933 = vrot.slane %v584, %v932
    %v934 = vlaneseq
    %v935 = vshrl.u32 %v934, 7
    %v936 = vsub.s32 4, %v935
    %v937 = vrot.slane %v586, %v936
    %v938 = vlaneseq
    %v939 = vshrl.u32 %v938, 7
    %v940 = vsub.s32 4, %v939
    %v941 = vrot.slane %v588, %v940
    %v942 = vmul.f32 %v896, %v929
    %v943 = vmul.f32 %v900, %v929
    %v944 = vmul.f32 %v904, %v933
    %v945 = vmul.f32 %v908, %v933
    %v946 = vmul.f32 %v912, %v937
    %v947 = vmul.f32 %v916, %v937
    %v948 = vmul.f32 %v920, %v941
    %v949 = vmul.f32 %v924, %v941
    %v950 = vadd.f32 %v886, %v942
    %v951 = vadd.f32 %v887, %v943
    %v952 = vadd.f32 %v888, %v944
    %v953 = vadd.f32 %v889, %v945
    %v954 = vadd.f32 %v890, %v946
    %v955 = vadd.f32 %v891, %v947
    %v956 = vadd.f32 %v892, %v948
    %v957 = vadd.f32 %v893, %v949
    %958 = vset.pattern.permute.xlu0 5
    %959 = vperm.xlu0 %958, %v590
    %v960 = vpop.permute.xlu0 %959
    %962 = vset.pattern.permute.xlu0 5
    %963 = vperm.xlu0 %962, %v591
    %v964 = vpop.permute.xlu0 %963
    %966 = vset.pattern.permute.xlu0 5
    %967 = vperm.xlu0 %966, %v592
    %v968 = vpop.permute.xlu0 %967
    %970 = vset.pattern.permute.xlu0 5
    %971 = vperm.xlu0 %970, %v593
    %v972 = vpop.permute.xlu0 %971
    %974 = vset.pattern.permute.xlu0 5
    %975 = vperm.xlu0 %974, %v594
    %v976 = vpop.permute.xlu0 %975
    %978 = vset.pattern.permute.xlu0 5
    %979 = vperm.xlu0 %978, %v595
    %v980 = vpop.permute.xlu0 %979
    %982 = vset.pattern.permute.xlu0 5
    %983 = vperm.xlu0 %982, %v596
    %v984 = vpop.permute.xlu0 %983
    %986 = vset.pattern.permute.xlu0 5
    %987 = vperm.xlu0 %986, %v597
    %v988 = vpop.permute.xlu0 %987
    %v990 = vlaneseq
    %v991 = vshrl.u32 %v990, 7
    %v992 = vsub.s32 5, %v991
    %v993 = vrot.slane %v582, %v992
    %v994 = vlaneseq
    %v995 = vshrl.u32 %v994, 7
    %v996 = vsub.s32 5, %v995
    %v997 = vrot.slane %v584, %v996
    %v998 = vlaneseq
    %v999 = vshrl.u32 %v998, 7
    %v1000 = vsub.s32 5, %v999
    %v1001 = vrot.slane %v586, %v1000
    %v1002 = vlaneseq
    %v1003 = vshrl.u32 %v1002, 7
    %v1004 = vsub.s32 5, %v1003
    %v1005 = vrot.slane %v588, %v1004
    %v1006 = vmul.f32 %v960, %v993
    %v1007 = vmul.f32 %v964, %v993
    %v1008 = vmul.f32 %v968, %v997
    %v1009 = vmul.f32 %v972, %v997
    %v1010 = vmul.f32 %v976, %v1001
    %v1011 = vmul.f32 %v980, %v1001
    %v1012 = vmul.f32 %v984, %v1005
    %v1013 = vmul.f32 %v988, %v1005
    %v1014 = vadd.f32 %v950, %v1006
    %v1015 = vadd.f32 %v951, %v1007
    %v1016 = vadd.f32 %v952, %v1008
    %v1017 = vadd.f32 %v953, %v1009
    %v1018 = vadd.f32 %v954, %v1010
    %v1019 = vadd.f32 %v955, %v1011
    %v1020 = vadd.f32 %v956, %v1012
    %v1021 = vadd.f32 %v957, %v1013
    %1022 = vset.pattern.permute.xlu0 6
    %1023 = vperm.xlu0 %1022, %v590
    %v1024 = vpop.permute.xlu0 %1023
    %1026 = vset.pattern.permute.xlu0 6
    %1027 = vperm.xlu0 %1026, %v591
    %v1028 = vpop.permute.xlu0 %1027
    %1030 = vset.pattern.permute.xlu0 6
    %1031 = vperm.xlu0 %1030, %v592
    %v1032 = vpop.permute.xlu0 %1031
    %1034 = vset.pattern.permute.xlu0 6
    %1035 = vperm.xlu0 %1034, %v593
    %v1036 = vpop.permute.xlu0 %1035
    %1038 = vset.pattern.permute.xlu0 6
    %1039 = vperm.xlu0 %1038, %v594
    %v1040 = vpop.permute.xlu0 %1039
    %1042 = vset.pattern.permute.xlu0 6
    %1043 = vperm.xlu0 %1042, %v595
    %v1044 = vpop.permute.xlu0 %1043
    %1046 = vset.pattern.permute.xlu0 6
    %1047 = vperm.xlu0 %1046, %v596
    %v1048 = vpop.permute.xlu0 %1047
    %1050 = vset.pattern.permute.xlu0 6
    %1051 = vperm.xlu0 %1050, %v597
    %v1052 = vpop.permute.xlu0 %1051
    %v1054 = vlaneseq
    %v1055 = vshrl.u32 %v1054, 7
    %v1056 = vsub.s32 6, %v1055
    %v1057 = vrot.slane %v582, %v1056
    %v1058 = vlaneseq
    %v1059 = vshrl.u32 %v1058, 7
    %v1060 = vsub.s32 6, %v1059
    %v1061 = vrot.slane %v584, %v1060
    %v1062 = vlaneseq
    %v1063 = vshrl.u32 %v1062, 7
    %v1064 = vsub.s32 6, %v1063
    %v1065 = vrot.slane %v586, %v1064
    %v1066 = vlaneseq
    %v1067 = vshrl.u32 %v1066, 7
    %v1068 = vsub.s32 6, %v1067
    %v1069 = vrot.slane %v588, %v1068
    %v1070 = vmul.f32 %v1024, %v1057
    %v1071 = vmul.f32 %v1028, %v1057
    %v1072 = vmul.f32 %v1032, %v1061
    %v1073 = vmul.f32 %v1036, %v1061
    %v1074 = vmul.f32 %v1040, %v1065
    %v1075 = vmul.f32 %v1044, %v1065
    %v1076 = vmul.f32 %v1048, %v1069
    %v1077 = vmul.f32 %v1052, %v1069
    %v1078 = vadd.f32 %v1014, %v1070
    %v1079 = vadd.f32 %v1015, %v1071
    %v1080 = vadd.f32 %v1016, %v1072
    %v1081 = vadd.f32 %v1017, %v1073
    %v1082 = vadd.f32 %v1018, %v1074
    %v1083 = vadd.f32 %v1019, %v1075
    %v1084 = vadd.f32 %v1020, %v1076
    %v1085 = vadd.f32 %v1021, %v1077
    %1086 = vset.pattern.permute.xlu0 7
    %1087 = vperm.xlu0 %1086, %v590
    %v1088 = vpop.permute.xlu0 %1087
    %1090 = vset.pattern.permute.xlu0 7
    %1091 = vperm.xlu0 %1090, %v591
    %v1092 = vpop.permute.xlu0 %1091
    %1094 = vset.pattern.permute.xlu0 7
    %1095 = vperm.xlu0 %1094, %v592
    %v1096 = vpop.permute.xlu0 %1095
    %1098 = vset.pattern.permute.xlu0 7
    %1099 = vperm.xlu0 %1098, %v593
    %v1100 = vpop.permute.xlu0 %1099
    %1102 = vset.pattern.permute.xlu0 7
    %1103 = vperm.xlu0 %1102, %v594
    %v1104 = vpop.permute.xlu0 %1103
    %1106 = vset.pattern.permute.xlu0 7
    %1107 = vperm.xlu0 %1106, %v595
    %v1108 = vpop.permute.xlu0 %1107
    %1110 = vset.pattern.permute.xlu0 7
    %1111 = vperm.xlu0 %1110, %v596
    %v1112 = vpop.permute.xlu0 %1111
    %1114 = vset.pattern.permute.xlu0 7
    %1115 = vperm.xlu0 %1114, %v597
    %v1116 = vpop.permute.xlu0 %1115
    %v1118 = vlaneseq
    %v1119 = vshrl.u32 %v1118, 7
    %v1120 = vsub.s32 7, %v1119
    %v1121 = vrot.slane %v582, %v1120
    %v1122 = vlaneseq
    %v1123 = vshrl.u32 %v1122, 7
    %v1124 = vsub.s32 7, %v1123
    %v1125 = vrot.slane %v584, %v1124
    %v1126 = vlaneseq
    %v1127 = vshrl.u32 %v1126, 7
    %v1128 = vsub.s32 7, %v1127
    %v1129 = vrot.slane %v586, %v1128
    %v1130 = vlaneseq
    %v1131 = vshrl.u32 %v1130, 7
    %v1132 = vsub.s32 7, %v1131
    %v1133 = vrot.slane %v588, %v1132
    %v1134 = vmul.f32 %v1088, %v1121
    %v1135 = vmul.f32 %v1092, %v1121
    %v1136 = vmul.f32 %v1096, %v1125
    %v1137 = vmul.f32 %v1100, %v1125
    %v1138 = vmul.f32 %v1104, %v1129
    %v1139 = vmul.f32 %v1108, %v1129
    %v1140 = vmul.f32 %v1112, %v1133
    %v1141 = vmul.f32 %v1116, %v1133
    %v1142 = vadd.f32 %v1078, %v1134
    %v1143 = vadd.f32 %v1079, %v1135
    %v1144 = vadd.f32 %v1080, %v1136
    %v1145 = vadd.f32 %v1081, %v1137
    %v1146 = vadd.f32 %v1082, %v1138
    %v1147 = vadd.f32 %v1083, %v1139
    %v1148 = vadd.f32 %v1084, %v1140
    %v1149 = vadd.f32 %v1085, %v1141
    %1150 = vset.pattern.permute.xlu0 8
    %1151 = vperm.xlu0 %1150, %v590
    %v1152 = vpop.permute.xlu0 %1151
    %1154 = vset.pattern.permute.xlu0 8
    %1155 = vperm.xlu0 %1154, %v591
    %v1156 = vpop.permute.xlu0 %1155
    %1158 = vset.pattern.permute.xlu0 8
    %1159 = vperm.xlu0 %1158, %v592
    %v1160 = vpop.permute.xlu0 %1159
    %1162 = vset.pattern.permute.xlu0 8
    %1163 = vperm.xlu0 %1162, %v593
    %v1164 = vpop.permute.xlu0 %1163
    %1166 = vset.pattern.permute.xlu0 8
    %1167 = vperm.xlu0 %1166, %v594
    %v1168 = vpop.permute.xlu0 %1167
    %1170 = vset.pattern.permute.xlu0 8
    %1171 = vperm.xlu0 %1170, %v595
    %v1172 = vpop.permute.xlu0 %1171
    %1174 = vset.pattern.permute.xlu0 8
    %1175 = vperm.xlu0 %1174, %v596
    %v1176 = vpop.permute.xlu0 %1175
    %1178 = vset.pattern.permute.xlu0 8
    %1179 = vperm.xlu0 %1178, %v597
    %v1180 = vpop.permute.xlu0 %1179
    %v1182 = vlaneseq
    %v1183 = vshrl.u32 %v1182, 7
    %v1184 = vsub.s32 0, %v1183
    %v1185 = vrot.slane %v583, %v1184
    %v1186 = vlaneseq
    %v1187 = vshrl.u32 %v1186, 7
    %v1188 = vsub.s32 0, %v1187
    %v1189 = vrot.slane %v585, %v1188
    %v1190 = vlaneseq
    %v1191 = vshrl.u32 %v1190, 7
    %v1192 = vsub.s32 0, %v1191
    %v1193 = vrot.slane %v587, %v1192
    %v1194 = vlaneseq
    %v1195 = vshrl.u32 %v1194, 7
    %v1196 = vsub.s32 0, %v1195
    %v1197 = vrot.slane %v589, %v1196
    %v1198 = vmul.f32 %v1152, %v1185
    %v1199 = vmul.f32 %v1156, %v1185
    %v1200 = vmul.f32 %v1160, %v1189
    %v1201 = vmul.f32 %v1164, %v1189
    %v1202 = vmul.f32 %v1168, %v1193
    %v1203 = vmul.f32 %v1172, %v1193
    %v1204 = vmul.f32 %v1176, %v1197
    %v1205 = vmul.f32 %v1180, %v1197
    %v1206 = vadd.f32 %v1142, %v1198
    %v1207 = vadd.f32 %v1143, %v1199
    %v1208 = vadd.f32 %v1144, %v1200
    %v1209 = vadd.f32 %v1145, %v1201
    %v1210 = vadd.f32 %v1146, %v1202
    %v1211 = vadd.f32 %v1147, %v1203
    %v1212 = vadd.f32 %v1148, %v1204
    %v1213 = vadd.f32 %v1149, %v1205
    %1214 = vset.pattern.permute.xlu0 9
    %1215 = vperm.xlu0 %1214, %v590
    %v1216 = vpop.permute.xlu0 %1215
    %1218 = vset.pattern.permute.xlu0 9
    %1219 = vperm.xlu0 %1218, %v591
    %v1220 = vpop.permute.xlu0 %1219
    %1222 = vset.pattern.permute.xlu0 9
    %1223 = vperm.xlu0 %1222, %v592
    %v1224 = vpop.permute.xlu0 %1223
    %1226 = vset.pattern.permute.xlu0 9
    %1227 = vperm.xlu0 %1226, %v593
    %v1228 = vpop.permute.xlu0 %1227
    %1230 = vset.pattern.permute.xlu0 9
    %1231 = vperm.xlu0 %1230, %v594
    %v1232 = vpop.permute.xlu0 %1231
    %1234 = vset.pattern.permute.xlu0 9
    %1235 = vperm.xlu0 %1234, %v595
    %v1236 = vpop.permute.xlu0 %1235
    %1238 = vset.pattern.permute.xlu0 9
    %1239 = vperm.xlu0 %1238, %v596
    %v1240 = vpop.permute.xlu0 %1239
    %1242 = vset.pattern.permute.xlu0 9
    %1243 = vperm.xlu0 %1242, %v597
    %v1244 = vpop.permute.xlu0 %1243
    %v1246 = vlaneseq
    %v1247 = vshrl.u32 %v1246, 7
    %v1248 = vsub.s32 1, %v1247
    %v1249 = vrot.slane %v583, %v1248
    %v1250 = vlaneseq
    %v1251 = vshrl.u32 %v1250, 7
    %v1252 = vsub.s32 1, %v1251
    %v1253 = vrot.slane %v585, %v1252
    %v1254 = vlaneseq
    %v1255 = vshrl.u32 %v1254, 7
    %v1256 = vsub.s32 1, %v1255
    %v1257 = vrot.slane %v587, %v1256
    %v1258 = vlaneseq
    %v1259 = vshrl.u32 %v1258, 7
    %v1260 = vsub.s32 1, %v1259
    %v1261 = vrot.slane %v589, %v1260
    %v1262 = vmul.f32 %v1216, %v1249
    %v1263 = vmul.f32 %v1220, %v1249
    %v1264 = vmul.f32 %v1224, %v1253
    %v1265 = vmul.f32 %v1228, %v1253
    %v1266 = vmul.f32 %v1232, %v1257
    %v1267 = vmul.f32 %v1236, %v1257
    %v1268 = vmul.f32 %v1240, %v1261
    %v1269 = vmul.f32 %v1244, %v1261
    %v1270 = vadd.f32 %v1206, %v1262
    %v1271 = vadd.f32 %v1207, %v1263
    %v1272 = vadd.f32 %v1208, %v1264
    %v1273 = vadd.f32 %v1209, %v1265
    %v1274 = vadd.f32 %v1210, %v1266
    %v1275 = vadd.f32 %v1211, %v1267
    %v1276 = vadd.f32 %v1212, %v1268
    %v1277 = vadd.f32 %v1213, %v1269
    %1278 = vset.pattern.permute.xlu0 10
    %1279 = vperm.xlu0 %1278, %v590
    %v1280 = vpop.permute.xlu0 %1279
    %1282 = vset.pattern.permute.xlu0 10
    %1283 = vperm.xlu0 %1282, %v591
    %v1284 = vpop.permute.xlu0 %1283
    %1286 = vset.pattern.permute.xlu0 10
    %1287 = vperm.xlu0 %1286, %v592
    %v1288 = vpop.permute.xlu0 %1287
    %1290 = vset.pattern.permute.xlu0 10
    %1291 = vperm.xlu0 %1290, %v593
    %v1292 = vpop.permute.xlu0 %1291
    %1294 = vset.pattern.permute.xlu0 10
    %1295 = vperm.xlu0 %1294, %v594
    %v1296 = vpop.permute.xlu0 %1295
    %1298 = vset.pattern.permute.xlu0 10
    %1299 = vperm.xlu0 %1298, %v595
    %v1300 = vpop.permute.xlu0 %1299
    %1302 = vset.pattern.permute.xlu0 10
    %1303 = vperm.xlu0 %1302, %v596
    %v1304 = vpop.permute.xlu0 %1303
    %1306 = vset.pattern.permute.xlu0 10
    %1307 = vperm.xlu0 %1306, %v597
    %v1308 = vpop.permute.xlu0 %1307
    %v1310 = vlaneseq
    %v1311 = vshrl.u32 %v1310, 7
    %v1312 = vsub.s32 2, %v1311
    %v1313 = vrot.slane %v583, %v1312
    %v1314 = vlaneseq
    %v1315 = vshrl.u32 %v1314, 7
    %v1316 = vsub.s32 2, %v1315
    %v1317 = vrot.slane %v585, %v1316
    %v1318 = vlaneseq
    %v1319 = vshrl.u32 %v1318, 7
    %v1320 = vsub.s32 2, %v1319
    %v1321 = vrot.slane %v587, %v1320
    %v1322 = vlaneseq
    %v1323 = vshrl.u32 %v1322, 7
    %v1324 = vsub.s32 2, %v1323
    %v1325 = vrot.slane %v589, %v1324
    %v1326 = vmul.f32 %v1280, %v1313
    %v1327 = vmul.f32 %v1284, %v1313
    %v1328 = vmul.f32 %v1288, %v1317
    %v1329 = vmul.f32 %v1292, %v1317
    %v1330 = vmul.f32 %v1296, %v1321
    %v1331 = vmul.f32 %v1300, %v1321
    %v1332 = vmul.f32 %v1304, %v1325
    %v1333 = vmul.f32 %v1308, %v1325
    %v1334 = vadd.f32 %v1270, %v1326
    %v1335 = vadd.f32 %v1271, %v1327
    %v1336 = vadd.f32 %v1272, %v1328
    %v1337 = vadd.f32 %v1273, %v1329
    %v1338 = vadd.f32 %v1274, %v1330
    %v1339 = vadd.f32 %v1275, %v1331
    %v1340 = vadd.f32 %v1276, %v1332
    %v1341 = vadd.f32 %v1277, %v1333
    %1342 = vset.pattern.permute.xlu0 11
    %1343 = vperm.xlu0 %1342, %v590
    %v1344 = vpop.permute.xlu0 %1343
    %1346 = vset.pattern.permute.xlu0 11
    %1347 = vperm.xlu0 %1346, %v591
    %v1348 = vpop.permute.xlu0 %1347
    %1350 = vset.pattern.permute.xlu0 11
    %1351 = vperm.xlu0 %1350, %v592
    %v1352 = vpop.permute.xlu0 %1351
    %1354 = vset.pattern.permute.xlu0 11
    %1355 = vperm.xlu0 %1354, %v593
    %v1356 = vpop.permute.xlu0 %1355
    %1358 = vset.pattern.permute.xlu0 11
    %1359 = vperm.xlu0 %1358, %v594
    %v1360 = vpop.permute.xlu0 %1359
    %1362 = vset.pattern.permute.xlu0 11
    %1363 = vperm.xlu0 %1362, %v595
    %v1364 = vpop.permute.xlu0 %1363
    %1366 = vset.pattern.permute.xlu0 11
    %1367 = vperm.xlu0 %1366, %v596
    %v1368 = vpop.permute.xlu0 %1367
    %1370 = vset.pattern.permute.xlu0 11
    %1371 = vperm.xlu0 %1370, %v597
    %v1372 = vpop.permute.xlu0 %1371
    %v1374 = vlaneseq
    %v1375 = vshrl.u32 %v1374, 7
    %v1376 = vsub.s32 3, %v1375
    %v1377 = vrot.slane %v583, %v1376
    %v1378 = vlaneseq
    %v1379 = vshrl.u32 %v1378, 7
    %v1380 = vsub.s32 3, %v1379
    %v1381 = vrot.slane %v585, %v1380
    %v1382 = vlaneseq
    %v1383 = vshrl.u32 %v1382, 7
    %v1384 = vsub.s32 3, %v1383
    %v1385 = vrot.slane %v587, %v1384
    %v1386 = vlaneseq
    %v1387 = vshrl.u32 %v1386, 7
    %v1388 = vsub.s32 3, %v1387
    %v1389 = vrot.slane %v589, %v1388
    %v1390 = vmul.f32 %v1344, %v1377
    %v1391 = vmul.f32 %v1348, %v1377
    %v1392 = vmul.f32 %v1352, %v1381
    %v1393 = vmul.f32 %v1356, %v1381
    %v1394 = vmul.f32 %v1360, %v1385
    %v1395 = vmul.f32 %v1364, %v1385
    %v1396 = vmul.f32 %v1368, %v1389
    %v1397 = vmul.f32 %v1372, %v1389
    %v1398 = vadd.f32 %v1334, %v1390
    %v1399 = vadd.f32 %v1335, %v1391
    %v1400 = vadd.f32 %v1336, %v1392
    %v1401 = vadd.f32 %v1337, %v1393
    %v1402 = vadd.f32 %v1338, %v1394
    %v1403 = vadd.f32 %v1339, %v1395
    %v1404 = vadd.f32 %v1340, %v1396
    %v1405 = vadd.f32 %v1341, %v1397
    %1406 = vset.pattern.permute.xlu0 12
    %1407 = vperm.xlu0 %1406, %v590
    %v1408 = vpop.permute.xlu0 %1407
    %1410 = vset.pattern.permute.xlu0 12
    %1411 = vperm.xlu0 %1410, %v591
    %v1412 = vpop.permute.xlu0 %1411
    %1414 = vset.pattern.permute.xlu0 12
    %1415 = vperm.xlu0 %1414, %v592
    %v1416 = vpop.permute.xlu0 %1415
    %1418 = vset.pattern.permute.xlu0 12
    %1419 = vperm.xlu0 %1418, %v593
    %v1420 = vpop.permute.xlu0 %1419
    %1422 = vset.pattern.permute.xlu0 12
    %1423 = vperm.xlu0 %1422, %v594
    %v1424 = vpop.permute.xlu0 %1423
    %1426 = vset.pattern.permute.xlu0 12
    %1427 = vperm.xlu0 %1426, %v595
    %v1428 = vpop.permute.xlu0 %1427
    %1430 = vset.pattern.permute.xlu0 12
    %1431 = vperm.xlu0 %1430, %v596
    %v1432 = vpop.permute.xlu0 %1431
    %1434 = vset.pattern.permute.xlu0 12
    %1435 = vperm.xlu0 %1434, %v597
    %v1436 = vpop.permute.xlu0 %1435
    %v1438 = vlaneseq
    %v1439 = vshrl.u32 %v1438, 7
    %v1440 = vsub.s32 4, %v1439
    %v1441 = vrot.slane %v583, %v1440
    %v1442 = vlaneseq
    %v1443 = vshrl.u32 %v1442, 7
    %v1444 = vsub.s32 4, %v1443
    %v1445 = vrot.slane %v585, %v1444
    %v1446 = vlaneseq
    %v1447 = vshrl.u32 %v1446, 7
    %v1448 = vsub.s32 4, %v1447
    %v1449 = vrot.slane %v587, %v1448
    %v1450 = vlaneseq
    %v1451 = vshrl.u32 %v1450, 7
    %v1452 = vsub.s32 4, %v1451
    %v1453 = vrot.slane %v589, %v1452
    %v1454 = vmul.f32 %v1408, %v1441
    %v1455 = vmul.f32 %v1412, %v1441
    %v1456 = vmul.f32 %v1416, %v1445
    %v1457 = vmul.f32 %v1420, %v1445
    %v1458 = vmul.f32 %v1424, %v1449
    %v1459 = vmul.f32 %v1428, %v1449
    %v1460 = vmul.f32 %v1432, %v1453
    %v1461 = vmul.f32 %v1436, %v1453
    %v1462 = vadd.f32 %v1398, %v1454
    %v1463 = vadd.f32 %v1399, %v1455
    %v1464 = vadd.f32 %v1400, %v1456
    %v1465 = vadd.f32 %v1401, %v1457
    %v1466 = vadd.f32 %v1402, %v1458
    %v1467 = vadd.f32 %v1403, %v1459
    %v1468 = vadd.f32 %v1404, %v1460
    %v1469 = vadd.f32 %v1405, %v1461
    %1470 = vset.pattern.permute.xlu0 13
    %1471 = vperm.xlu0 %1470, %v590
    %v1472 = vpop.permute.xlu0 %1471
    %1474 = vset.pattern.permute.xlu0 13
    %1475 = vperm.xlu0 %1474, %v591
    %v1476 = vpop.permute.xlu0 %1475
    %1478 = vset.pattern.permute.xlu0 13
    %1479 = vperm.xlu0 %1478, %v592
    %v1480 = vpop.permute.xlu0 %1479
    %1482 = vset.pattern.permute.xlu0 13
    %1483 = vperm.xlu0 %1482, %v593
    %v1484 = vpop.permute.xlu0 %1483
    %1486 = vset.pattern.permute.xlu0 13
    %1487 = vperm.xlu0 %1486, %v594
    %v1488 = vpop.permute.xlu0 %1487
    %1490 = vset.pattern.permute.xlu0 13
    %1491 = vperm.xlu0 %1490, %v595
    %v1492 = vpop.permute.xlu0 %1491
    %1494 = vset.pattern.permute.xlu0 13
    %1495 = vperm.xlu0 %1494, %v596
    %v1496 = vpop.permute.xlu0 %1495
    %1498 = vset.pattern.permute.xlu0 13
    %1499 = vperm.xlu0 %1498, %v597
    %v1500 = vpop.permute.xlu0 %1499
    %v1502 = vlaneseq
    %v1503 = vshrl.u32 %v1502, 7
    %v1504 = vsub.s32 5, %v1503
    %v1505 = vrot.slane %v583, %v1504
    %v1506 = vlaneseq
    %v1507 = vshrl.u32 %v1506, 7
    %v1508 = vsub.s32 5, %v1507
    %v1509 = vrot.slane %v585, %v1508
    %v1510 = vlaneseq
    %v1511 = vshrl.u32 %v1510, 7
    %v1512 = vsub.s32 5, %v1511
    %v1513 = vrot.slane %v587, %v1512
    %v1514 = vlaneseq
    %v1515 = vshrl.u32 %v1514, 7
    %v1516 = vsub.s32 5, %v1515
    %v1517 = vrot.slane %v589, %v1516
    %v1518 = vmul.f32 %v1472, %v1505
    %v1519 = vmul.f32 %v1476, %v1505
    %v1520 = vmul.f32 %v1480, %v1509
    %v1521 = vmul.f32 %v1484, %v1509
    %v1522 = vmul.f32 %v1488, %v1513
    %v1523 = vmul.f32 %v1492, %v1513
    %v1524 = vmul.f32 %v1496, %v1517
    %v1525 = vmul.f32 %v1500, %v1517
    %v1526 = vadd.f32 %v1462, %v1518
    %v1527 = vadd.f32 %v1463, %v1519
    %v1528 = vadd.f32 %v1464, %v1520
    %v1529 = vadd.f32 %v1465, %v1521
    %v1530 = vadd.f32 %v1466, %v1522
    %v1531 = vadd.f32 %v1467, %v1523
    %v1532 = vadd.f32 %v1468, %v1524
    %v1533 = vadd.f32 %v1469, %v1525
    %1534 = vset.pattern.permute.xlu0 14
    %1535 = vperm.xlu0 %1534, %v590
    %v1536 = vpop.permute.xlu0 %1535
    %1538 = vset.pattern.permute.xlu0 14
    %1539 = vperm.xlu0 %1538, %v591
    %v1540 = vpop.permute.xlu0 %1539
    %1542 = vset.pattern.permute.xlu0 14
    %1543 = vperm.xlu0 %1542, %v592
    %v1544 = vpop.permute.xlu0 %1543
    %1546 = vset.pattern.permute.xlu0 14
    %1547 = vperm.xlu0 %1546, %v593
    %v1548 = vpop.permute.xlu0 %1547
    %1550 = vset.pattern.permute.xlu0 14
    %1551 = vperm.xlu0 %1550, %v594
    %v1552 = vpop.permute.xlu0 %1551
    %1554 = vset.pattern.permute.xlu0 14
    %1555 = vperm.xlu0 %1554, %v595
    %v1556 = vpop.permute.xlu0 %1555
    %1558 = vset.pattern.permute.xlu0 14
    %1559 = vperm.xlu0 %1558, %v596
    %v1560 = vpop.permute.xlu0 %1559
    %1562 = vset.pattern.permute.xlu0 14
    %1563 = vperm.xlu0 %1562, %v597
    %v1564 = vpop.permute.xlu0 %1563
    %v1566 = vlaneseq
    %v1567 = vshrl.u32 %v1566, 7
    %v1568 = vsub.s32 6, %v1567
    %v1569 = vrot.slane %v583, %v1568
    %v1570 = vlaneseq
    %v1571 = vshrl.u32 %v1570, 7
    %v1572 = vsub.s32 6, %v1571
    %v1573 = vrot.slane %v585, %v1572
    %v1574 = vlaneseq
    %v1575 = vshrl.u32 %v1574, 7
    %v1576 = vsub.s32 6, %v1575
    %v1577 = vrot.slane %v587, %v1576
    %v1578 = vlaneseq
    %v1579 = vshrl.u32 %v1578, 7
    %v1580 = vsub.s32 6, %v1579
    %v1581 = vrot.slane %v589, %v1580
    %v1582 = vmul.f32 %v1536, %v1569
    %v1583 = vmul.f32 %v1540, %v1569
    %v1584 = vmul.f32 %v1544, %v1573
    %v1585 = vmul.f32 %v1548, %v1573
    %v1586 = vmul.f32 %v1552, %v1577
    %v1587 = vmul.f32 %v1556, %v1577
    %v1588 = vmul.f32 %v1560, %v1581
    %v1589 = vmul.f32 %v1564, %v1581
    %v1590 = vadd.f32 %v1526, %v1582
    %v1591 = vadd.f32 %v1527, %v1583
    %v1592 = vadd.f32 %v1528, %v1584
    %v1593 = vadd.f32 %v1529, %v1585
    %v1594 = vadd.f32 %v1530, %v1586
    %v1595 = vadd.f32 %v1531, %v1587
    %v1596 = vadd.f32 %v1532, %v1588
    %v1597 = vadd.f32 %v1533, %v1589
    %1598 = vset.pattern.permute.xlu0 15
    %1599 = vperm.xlu0 %1598, %v590
    %v1600 = vpop.permute.xlu0 %1599
    %1602 = vset.pattern.permute.xlu0 15
    %1603 = vperm.xlu0 %1602, %v591
    %v1604 = vpop.permute.xlu0 %1603
    %1606 = vset.pattern.permute.xlu0 15
    %1607 = vperm.xlu0 %1606, %v592
    %v1608 = vpop.permute.xlu0 %1607
    %1610 = vset.pattern.permute.xlu0 15
    %1611 = vperm.xlu0 %1610, %v593
    %v1612 = vpop.permute.xlu0 %1611
    %1614 = vset.pattern.permute.xlu0 15
    %1615 = vperm.xlu0 %1614, %v594
    %v1616 = vpop.permute.xlu0 %1615
    %1618 = vset.pattern.permute.xlu0 15
    %1619 = vperm.xlu0 %1618, %v595
    %v1620 = vpop.permute.xlu0 %1619
    %1622 = vset.pattern.permute.xlu0 15
    %1623 = vperm.xlu0 %1622, %v596
    %v1624 = vpop.permute.xlu0 %1623
    %1626 = vset.pattern.permute.xlu0 15
    %1627 = vperm.xlu0 %1626, %v597
    %v1628 = vpop.permute.xlu0 %1627
    %v1630 = vlaneseq
    %v1631 = vshrl.u32 %v1630, 7
    %v1632 = vsub.s32 7, %v1631
    %v1633 = vrot.slane %v583, %v1632
    %v1634 = vlaneseq
    %v1635 = vshrl.u32 %v1634, 7
    %v1636 = vsub.s32 7, %v1635
    %v1637 = vrot.slane %v585, %v1636
    %v1638 = vlaneseq
    %v1639 = vshrl.u32 %v1638, 7
    %v1640 = vsub.s32 7, %v1639
    %v1641 = vrot.slane %v587, %v1640
    %v1642 = vlaneseq
    %v1643 = vshrl.u32 %v1642, 7
    %v1644 = vsub.s32 7, %v1643
    %v1645 = vrot.slane %v589, %v1644
    %v1646 = vmul.f32 %v1600, %v1633
    %v1647 = vmul.f32 %v1604, %v1633
    %v1648 = vmul.f32 %v1608, %v1637
    %v1649 = vmul.f32 %v1612, %v1637
    %v1650 = vmul.f32 %v1616, %v1641
    %v1651 = vmul.f32 %v1620, %v1641
    %v1652 = vmul.f32 %v1624, %v1645
    %v1653 = vmul.f32 %v1628, %v1645
    %v1654 = vadd.f32 %v1590, %v1646
    %v1655 = vadd.f32 %v1591, %v1647
    %v1656 = vadd.f32 %v1592, %v1648
    %v1657 = vadd.f32 %v1593, %v1649
    %v1658 = vadd.f32 %v1594, %v1650
    %v1659 = vadd.f32 %v1595, %v1651
    %v1660 = vadd.f32 %v1596, %v1652
    %v1661 = vadd.f32 %v1597, %v1653
    %v1662 = vmax.f32 %v1654, 0.0
    %v1663 = vmax.f32 %v1655, 0.0
    %v1664 = vmax.f32 %v1656, 0.0
    %v1665 = vmax.f32 %v1657, 0.0
    %v1666 = vmax.f32 %v1658, 0.0
    %v1667 = vmax.f32 %v1659, 0.0
    %v1668 = vmax.f32 %v1660, 0.0
    %v1669 = vmax.f32 %v1661, 0.0
    %v1670 = vld [vmem:[%s3] sm:$0x1]
    %v1671 = vld [vmem:[%s3 + $0x1] sm:$0x1]
    %v1672 = vld [vmem:[%s3 + $0x2] sm:$0x1]
    %v1673 = vld [vmem:[%s3 + $0x3] sm:$0x1]
    %1675 = vset.pattern.permute.xlu0 16
    %1676 = vperm.xlu0 %1675, %v1670
    %v1677 = vpop.permute.xlu0 %1676
    %v1679 = vlaneseq
    %v1680 = vshrl.u32 %v1679, 7
    %v1681 = vsub.s32 0, %v1680
    %v1682 = vrot.slane %v1677, %v1681
    %1684 = vset.pattern.permute.xlu0 16
    %1685 = vperm.xlu0 %1684, %v1671
    %v1686 = vpop.permute.xlu0 %1685
    %v1688 = vlaneseq
    %v1689 = vshrl.u32 %v1688, 7
    %v1690 = vsub.s32 0, %v1689
    %v1691 = vrot.slane %v1686, %v1690
    %1693 = vset.pattern.permute.xlu0 16
    %1694 = vperm.xlu0 %1693, %v1672
    %v1695 = vpop.permute.xlu0 %1694
    %v1697 = vlaneseq
    %v1698 = vshrl.u32 %v1697, 7
    %v1699 = vsub.s32 0, %v1698
    %v1700 = vrot.slane %v1695, %v1699
    %1702 = vset.pattern.permute.xlu0 16
    %1703 = vperm.xlu0 %1702, %v1673
    %v1704 = vpop.permute.xlu0 %1703
    %v1706 = vlaneseq
    %v1707 = vshrl.u32 %v1706, 7
    %v1708 = vsub.s32 0, %v1707
    %v1709 = vrot.slane %v1704, %v1708
    %1710 = vset.pattern.permute.xlu0 0
    %1711 = vperm.xlu0 %1710, %v1670
    %v1712 = vpop.permute.xlu0 %1711
    %v1714 = vlaneseq
    %v1715 = vshrl.u32 %v1714, 7
    %v1716 = vsub.s32 0, %v1715
    %v1717 = vrot.slane %v1712, %v1716
    %1718 = vset.pattern.permute.xlu0 0
    %1719 = vperm.xlu0 %1718, %v1671
    %v1720 = vpop.permute.xlu0 %1719
    %v1722 = vlaneseq
    %v1723 = vshrl.u32 %v1722, 7
    %v1724 = vsub.s32 0, %v1723
    %v1725 = vrot.slane %v1720, %v1724
    %1726 = vset.pattern.permute.xlu0 0
    %1727 = vperm.xlu0 %1726, %v1672
    %v1728 = vpop.permute.xlu0 %1727
    %v1730 = vlaneseq
    %v1731 = vshrl.u32 %v1730, 7
    %v1732 = vsub.s32 0, %v1731
    %v1733 = vrot.slane %v1728, %v1732
    %1734 = vset.pattern.permute.xlu0 0
    %1735 = vperm.xlu0 %1734, %v1673
    %v1736 = vpop.permute.xlu0 %1735
    %v1738 = vlaneseq
    %v1739 = vshrl.u32 %v1738, 7
    %v1740 = vsub.s32 0, %v1739
    %v1741 = vrot.slane %v1736, %v1740
    %v1742 = vmul.f32 %v1717, %v1662
    %v1743 = vmul.f32 %v1725, %v1664
    %v1744 = vmul.f32 %v1733, %v1666
    %v1745 = vmul.f32 %v1741, %v1668
    %v1746 = vadd.f32 %v1682, %v1742
    %v1747 = vadd.f32 %v1691, %v1743
    %v1748 = vadd.f32 %v1700, %v1744
    %v1749 = vadd.f32 %v1709, %v1745
    %1750 = vset.pattern.permute.xlu0 1
    %1751 = vperm.xlu0 %1750, %v1670
    %v1752 = vpop.permute.xlu0 %1751
    %v1754 = vlaneseq
    %v1755 = vshrl.u32 %v1754, 7
    %v1756 = vsub.s32 0, %v1755
    %v1757 = vrot.slane %v1752, %v1756
    %1758 = vset.pattern.permute.xlu0 1
    %1759 = vperm.xlu0 %1758, %v1671
    %v1760 = vpop.permute.xlu0 %1759
    %v1762 = vlaneseq
    %v1763 = vshrl.u32 %v1762, 7
    %v1764 = vsub.s32 0, %v1763
    %v1765 = vrot.slane %v1760, %v1764
    %1766 = vset.pattern.permute.xlu0 1
    %1767 = vperm.xlu0 %1766, %v1672
    %v1768 = vpop.permute.xlu0 %1767
    %v1770 = vlaneseq
    %v1771 = vshrl.u32 %v1770, 7
    %v1772 = vsub.s32 0, %v1771
    %v1773 = vrot.slane %v1768, %v1772
    %1774 = vset.pattern.permute.xlu0 1
    %1775 = vperm.xlu0 %1774, %v1673
    %v1776 = vpop.permute.xlu0 %1775
    %v1778 = vlaneseq
    %v1779 = vshrl.u32 %v1778, 7
    %v1780 = vsub.s32 0, %v1779
    %v1781 = vrot.slane %v1776, %v1780
    %v1782 = vmul.f32 %v1757, %v1662
    %v1783 = vmul.f32 %v1765, %v1664
    %v1784 = vmul.f32 %v1773, %v1666
    %v1785 = vmul.f32 %v1781, %v1668
    %v1790 = vrot.slane %v1782, 1
    %v1791 = vrot.slane %v1783, 1
    %v1792 = vrot.slane %v1784, 1
    %v1793 = vrot.slane %v1785, 1
    %v1798 = vadd.f32 %v1746, %v1790
    %v1799 = vadd.f32 %v1747, %v1791
    %v1800 = vadd.f32 %v1748, %v1792
    %v1801 = vadd.f32 %v1749, %v1793
    %1802 = vset.pattern.permute.xlu0 2
    %1803 = vperm.xlu0 %1802, %v1670
    %v1804 = vpop.permute.xlu0 %1803
    %v1806 = vlaneseq
    %v1807 = vshrl.u32 %v1806, 7
    %v1808 = vsub.s32 0, %v1807
    %v1809 = vrot.slane %v1804, %v1808
    %1810 = vset.pattern.permute.xlu0 2
    %1811 = vperm.xlu0 %1810, %v1671
    %v1812 = vpop.permute.xlu0 %1811
    %v1814 = vlaneseq
    %v1815 = vshrl.u32 %v1814, 7
    %v1816 = vsub.s32 0, %v1815
    %v1817 = vrot.slane %v1812, %v1816
    %1818 = vset.pattern.permute.xlu0 2
    %1819 = vperm.xlu0 %1818, %v1672
    %v1820 = vpop.permute.xlu0 %1819
    %v1822 = vlaneseq
    %v1823 = vshrl.u32 %v1822, 7
    %v1824 = vsub.s32 0, %v1823
    %v1825 = vrot.slane %v1820, %v1824
    %1826 = vset.pattern.permute.xlu0 2
    %1827 = vperm.xlu0 %1826, %v1673
    %v1828 = vpop.permute.xlu0 %1827
    %v1830 = vlaneseq
    %v1831 = vshrl.u32 %v1830, 7
    %v1832 = vsub.s32 0, %v1831
    %v1833 = vrot.slane %v1828, %v1832
    %v1834 = vmul.f32 %v1809, %v1662
    %v1835 = vmul.f32 %v1817, %v1664
    %v1836 = vmul.f32 %v1825, %v1666
    %v1837 = vmul.f32 %v1833, %v1668
    %v1842 = vrot.slane %v1834, 2
    %v1843 = vrot.slane %v1835, 2
    %v1844 = vrot.slane %v1836, 2
    %v1845 = vrot.slane %v1837, 2
    %v1850 = vadd.f32 %v1798, %v1842
    %v1851 = vadd.f32 %v1799, %v1843
    %v1852 = vadd.f32 %v1800, %v1844
    %v1853 = vadd.f32 %v1801, %v1845
    %1854 = vset.pattern.permute.xlu0 3
    %1855 = vperm.xlu0 %1854, %v1670
    %v1856 = vpop.permute.xlu0 %1855
    %v1858 = vlaneseq
    %v1859 = vshrl.u32 %v1858, 7
    %v1860 = vsub.s32 0, %v1859
    %v1861 = vrot.slane %v1856, %v1860
    %1862 = vset.pattern.permute.xlu0 3
    %1863 = vperm.xlu0 %1862, %v1671
    %v1864 = vpop.permute.xlu0 %1863
    %v1866 = vlaneseq
    %v1867 = vshrl.u32 %v1866, 7
    %v1868 = vsub.s32 0, %v1867
    %v1869 = vrot.slane %v1864, %v1868
    %1870 = vset.pattern.permute.xlu0 3
    %1871 = vperm.xlu0 %1870, %v1672
    %v1872 = vpop.permute.xlu0 %1871
    %v1874 = vlaneseq
    %v1875 = vshrl.u32 %v1874, 7
    %v1876 = vsub.s32 0, %v1875
    %v1877 = vrot.slane %v1872, %v1876
    %1878 = vset.pattern.permute.xlu0 3
    %1879 = vperm.xlu0 %1878, %v1673
    %v1880 = vpop.permute.xlu0 %1879
    %v1882 = vlaneseq
    %v1883 = vshrl.u32 %v1882, 7
    %v1884 = vsub.s32 0, %v1883
    %v1885 = vrot.slane %v1880, %v1884
    %v1886 = vmul.f32 %v1861, %v1662
    %v1887 = vmul.f32 %v1869, %v1664
    %v1888 = vmul.f32 %v1877, %v1666
    %v1889 = vmul.f32 %v1885, %v1668
    %v1894 = vrot.slane %v1886, 3
    %v1895 = vrot.slane %v1887, 3
    %v1896 = vrot.slane %v1888, 3
    %v1897 = vrot.slane %v1889, 3
    %v1902 = vadd.f32 %v1850, %v1894
    %v1903 = vadd.f32 %v1851, %v1895
    %v1904 = vadd.f32 %v1852, %v1896
    %v1905 = vadd.f32 %v1853, %v1897
    %1906 = vset.pattern.permute.xlu0 4
    %1907 = vperm.xlu0 %1906, %v1670
    %v1908 = vpop.permute.xlu0 %1907
    %v1910 = vlaneseq
    %v1911 = vshrl.u32 %v1910, 7
    %v1912 = vsub.s32 0, %v1911
    %v1913 = vrot.slane %v1908, %v1912
    %1914 = vset.pattern.permute.xlu0 4
    %1915 = vperm.xlu0 %1914, %v1671
    %v1916 = vpop.permute.xlu0 %1915
    %v1918 = vlaneseq
    %v1919 = vshrl.u32 %v1918, 7
    %v1920 = vsub.s32 0, %v1919
    %v1921 = vrot.slane %v1916, %v1920
    %1922 = vset.pattern.permute.xlu0 4
    %1923 = vperm.xlu0 %1922, %v1672
    %v1924 = vpop.permute.xlu0 %1923
    %v1926 = vlaneseq
    %v1927 = vshrl.u32 %v1926, 7
    %v1928 = vsub.s32 0, %v1927
    %v1929 = vrot.slane %v1924, %v1928
    %1930 = vset.pattern.permute.xlu0 4
    %1931 = vperm.xlu0 %1930, %v1673
    %v1932 = vpop.permute.xlu0 %1931
    %v1934 = vlaneseq
    %v1935 = vshrl.u32 %v1934, 7
    %v1936 = vsub.s32 0, %v1935
    %v1937 = vrot.slane %v1932, %v1936
    %v1938 = vmul.f32 %v1913, %v1662
    %v1939 = vmul.f32 %v1921, %v1664
    %v1940 = vmul.f32 %v1929, %v1666
    %v1941 = vmul.f32 %v1937, %v1668
    %v1946 = vrot.slane %v1938, 4
    %v1947 = vrot.slane %v1939, 4
    %v1948 = vrot.slane %v1940, 4
    %v1949 = vrot.slane %v1941, 4
    %v1954 = vadd.f32 %v1902, %v1946
    %v1955 = vadd.f32 %v1903, %v1947
    %v1956 = vadd.f32 %v1904, %v1948
    %v1957 = vadd.f32 %v1905, %v1949
    %1958 = vset.pattern.permute.xlu0 5
    %1959 = vperm.xlu0 %1958, %v1670
    %v1960 = vpop.permute.xlu0 %1959
    %v1962 = vlaneseq
    %v1963 = vshrl.u32 %v1962, 7
    %v1964 = vsub.s32 0, %v1963
    %v1965 = vrot.slane %v1960, %v1964
    %1966 = vset.pattern.permute.xlu0 5
    %1967 = vperm.xlu0 %1966, %v1671
    %v1968 = vpop.permute.xlu0 %1967
    %v1970 = vlaneseq
    %v1971 = vshrl.u32 %v1970, 7
    %v1972 = vsub.s32 0, %v1971
    %v1973 = vrot.slane %v1968, %v1972
    %1974 = vset.pattern.permute.xlu0 5
    %1975 = vperm.xlu0 %1974, %v1672
    %v1976 = vpop.permute.xlu0 %1975
    %v1978 = vlaneseq
    %v1979 = vshrl.u32 %v1978, 7
    %v1980 = vsub.s32 0, %v1979
    %v1981 = vrot.slane %v1976, %v1980
    %1982 = vset.pattern.permute.xlu0 5
    %1983 = vperm.xlu0 %1982, %v1673
    %v1984 = vpop.permute.xlu0 %1983
    %v1986 = vlaneseq
    %v1987 = vshrl.u32 %v1986, 7
    %v1988 = vsub.s32 0, %v1987
    %v1989 = vrot.slane %v1984, %v1988
    %v1990 = vmul.f32 %v1965, %v1662
    %v1991 = vmul.f32 %v1973, %v1664
    %v1992 = vmul.f32 %v1981, %v1666
    %v1993 = vmul.f32 %v1989, %v1668
    %v1998 = vrot.slane %v1990, 5
    %v1999 = vrot.slane %v1991, 5
    %v2000 = vrot.slane %v1992, 5
    %v2001 = vrot.slane %v1993, 5
    %v2006 = vadd.f32 %v1954, %v1998
    %v2007 = vadd.f32 %v1955, %v1999
    %v2008 = vadd.f32 %v1956, %v2000
    %v2009 = vadd.f32 %v1957, %v2001
    %2010 = vset.pattern.permute.xlu0 6
    %2011 = vperm.xlu0 %2010, %v1670
    %v2012 = vpop.permute.xlu0 %2011
    %v2014 = vlaneseq
    %v2015 = vshrl.u32 %v2014, 7
    %v2016 = vsub.s32 0, %v2015
    %v2017 = vrot.slane %v2012, %v2016
    %2018 = vset.pattern.permute.xlu0 6
    %2019 = vperm.xlu0 %2018, %v1671
    %v2020 = vpop.permute.xlu0 %2019
    %v2022 = vlaneseq
    %v2023 = vshrl.u32 %v2022, 7
    %v2024 = vsub.s32 0, %v2023
    %v2025 = vrot.slane %v2020, %v2024
    %2026 = vset.pattern.permute.xlu0 6
    %2027 = vperm.xlu0 %2026, %v1672
    %v2028 = vpop.permute.xlu0 %2027
    %v2030 = vlaneseq
    %v2031 = vshrl.u32 %v2030, 7
    %v2032 = vsub.s32 0, %v2031
    %v2033 = vrot.slane %v2028, %v2032
    %2034 = vset.pattern.permute.xlu0 6
    %2035 = vperm.xlu0 %2034, %v1673
    %v2036 = vpop.permute.xlu0 %2035
    %v2038 = vlaneseq
    %v2039 = vshrl.u32 %v2038, 7
    %v2040 = vsub.s32 0, %v2039
    %v2041 = vrot.slane %v2036, %v2040
    %v2042 = vmul.f32 %v2017, %v1662
    %v2043 = vmul.f32 %v2025, %v1664
    %v2044 = vmul.f32 %v2033, %v1666
    %v2045 = vmul.f32 %v2041, %v1668
    %v2050 = vrot.slane %v2042, 6
    %v2051 = vrot.slane %v2043, 6
    %v2052 = vrot.slane %v2044, 6
    %v2053 = vrot.slane %v2045, 6
    %v2058 = vadd.f32 %v2006, %v2050
    %v2059 = vadd.f32 %v2007, %v2051
    %v2060 = vadd.f32 %v2008, %v2052
    %v2061 = vadd.f32 %v2009, %v2053
    %2062 = vset.pattern.permute.xlu0 7
    %2063 = vperm.xlu0 %2062, %v1670
    %v2064 = vpop.permute.xlu0 %2063
    %v2066 = vlaneseq
    %v2067 = vshrl.u32 %v2066, 7
    %v2068 = vsub.s32 0, %v2067
    %v2069 = vrot.slane %v2064, %v2068
    %2070 = vset.pattern.permute.xlu0 7
    %2071 = vperm.xlu0 %2070, %v1671
    %v2072 = vpop.permute.xlu0 %2071
    %v2074 = vlaneseq
    %v2075 = vshrl.u32 %v2074, 7
    %v2076 = vsub.s32 0, %v2075
    %v2077 = vrot.slane %v2072, %v2076
    %2078 = vset.pattern.permute.xlu0 7
    %2079 = vperm.xlu0 %2078, %v1672
    %v2080 = vpop.permute.xlu0 %2079
    %v2082 = vlaneseq
    %v2083 = vshrl.u32 %v2082, 7
    %v2084 = vsub.s32 0, %v2083
    %v2085 = vrot.slane %v2080, %v2084
    %2086 = vset.pattern.permute.xlu0 7
    %2087 = vperm.xlu0 %2086, %v1673
    %v2088 = vpop.permute.xlu0 %2087
    %v2090 = vlaneseq
    %v2091 = vshrl.u32 %v2090, 7
    %v2092 = vsub.s32 0, %v2091
    %v2093 = vrot.slane %v2088, %v2092
    %v2094 = vmul.f32 %v2069, %v1662
    %v2095 = vmul.f32 %v2077, %v1664
    %v2096 = vmul.f32 %v2085, %v1666
    %v2097 = vmul.f32 %v2093, %v1668
    %v2102 = vrot.slane %v2094, 7
    %v2103 = vrot.slane %v2095, 7
    %v2104 = vrot.slane %v2096, 7
    %v2105 = vrot.slane %v2097, 7
    %v2110 = vadd.f32 %v2058, %v2102
    %v2111 = vadd.f32 %v2059, %v2103
    %v2112 = vadd.f32 %v2060, %v2104
    %v2113 = vadd.f32 %v2061, %v2105
    %2114 = vset.pattern.permute.xlu0 8
    %2115 = vperm.xlu0 %2114, %v1670
    %v2116 = vpop.permute.xlu0 %2115
    %v2118 = vlaneseq
    %v2119 = vshrl.u32 %v2118, 7
    %v2120 = vsub.s32 0, %v2119
    %v2121 = vrot.slane %v2116, %v2120
    %2122 = vset.pattern.permute.xlu0 8
    %2123 = vperm.xlu0 %2122, %v1671
    %v2124 = vpop.permute.xlu0 %2123
    %v2126 = vlaneseq
    %v2127 = vshrl.u32 %v2126, 7
    %v2128 = vsub.s32 0, %v2127
    %v2129 = vrot.slane %v2124, %v2128
    %2130 = vset.pattern.permute.xlu0 8
    %2131 = vperm.xlu0 %2130, %v1672
    %v2132 = vpop.permute.xlu0 %2131
    %v2134 = vlaneseq
    %v2135 = vshrl.u32 %v2134, 7
    %v2136 = vsub.s32 0, %v2135
    %v2137 = vrot.slane %v2132, %v2136
    %2138 = vset.pattern.permute.xlu0 8
    %2139 = vperm.xlu0 %2138, %v1673
    %v2140 = vpop.permute.xlu0 %2139
    %v2142 = vlaneseq
    %v2143 = vshrl.u32 %v2142, 7
    %v2144 = vsub.s32 0, %v2143
    %v2145 = vrot.slane %v2140, %v2144
    %v2146 = vmul.f32 %v2121, %v1663
    %v2147 = vmul.f32 %v2129, %v1665
    %v2148 = vmul.f32 %v2137, %v1667
    %v2149 = vmul.f32 %v2145, %v1669
    %v2150 = vadd.f32 %v2110, %v2146
    %v2151 = vadd.f32 %v2111, %v2147
    %v2152 = vadd.f32 %v2112, %v2148
    %v2153 = vadd.f32 %v2113, %v2149
    %2154 = vset.pattern.permute.xlu0 9
    %2155 = vperm.xlu0 %2154, %v1670
    %v2156 = vpop.permute.xlu0 %2155
    %v2158 = vlaneseq
    %v2159 = vshrl.u32 %v2158, 7
    %v2160 = vsub.s32 0, %v2159
    %v2161 = vrot.slane %v2156, %v2160
    %2162 = vset.pattern.permute.xlu0 9
    %2163 = vperm.xlu0 %2162, %v1671
    %v2164 = vpop.permute.xlu0 %2163
    %v2166 = vlaneseq
    %v2167 = vshrl.u32 %v2166, 7
    %v2168 = vsub.s32 0, %v2167
    %v2169 = vrot.slane %v2164, %v2168
    %2170 = vset.pattern.permute.xlu0 9
    %2171 = vperm.xlu0 %2170, %v1672
    %v2172 = vpop.permute.xlu0 %2171
    %v2174 = vlaneseq
    %v2175 = vshrl.u32 %v2174, 7
    %v2176 = vsub.s32 0, %v2175
    %v2177 = vrot.slane %v2172, %v2176
    %2178 = vset.pattern.permute.xlu0 9
    %2179 = vperm.xlu0 %2178, %v1673
    %v2180 = vpop.permute.xlu0 %2179
    %v2182 = vlaneseq
    %v2183 = vshrl.u32 %v2182, 7
    %v2184 = vsub.s32 0, %v2183
    %v2185 = vrot.slane %v2180, %v2184
    %v2186 = vmul.f32 %v2161, %v1663
    %v2187 = vmul.f32 %v2169, %v1665
    %v2188 = vmul.f32 %v2177, %v1667
    %v2189 = vmul.f32 %v2185, %v1669
    %v2194 = vrot.slane %v2186, 1
    %v2195 = vrot.slane %v2187, 1
    %v2196 = vrot.slane %v2188, 1
    %v2197 = vrot.slane %v2189, 1
    %v2202 = vadd.f32 %v2150, %v2194
    %v2203 = vadd.f32 %v2151, %v2195
    %v2204 = vadd.f32 %v2152, %v2196
    %v2205 = vadd.f32 %v2153, %v2197
    %2206 = vset.pattern.permute.xlu0 10
    %2207 = vperm.xlu0 %2206, %v1670
    %v2208 = vpop.permute.xlu0 %2207
    %v2210 = vlaneseq
    %v2211 = vshrl.u32 %v2210, 7
    %v2212 = vsub.s32 0, %v2211
    %v2213 = vrot.slane %v2208, %v2212
    %2214 = vset.pattern.permute.xlu0 10
    %2215 = vperm.xlu0 %2214, %v1671
    %v2216 = vpop.permute.xlu0 %2215
    %v2218 = vlaneseq
    %v2219 = vshrl.u32 %v2218, 7
    %v2220 = vsub.s32 0, %v2219
    %v2221 = vrot.slane %v2216, %v2220
    %2222 = vset.pattern.permute.xlu0 10
    %2223 = vperm.xlu0 %2222, %v1672
    %v2224 = vpop.permute.xlu0 %2223
    %v2226 = vlaneseq
    %v2227 = vshrl.u32 %v2226, 7
    %v2228 = vsub.s32 0, %v2227
    %v2229 = vrot.slane %v2224, %v2228
    %2230 = vset.pattern.permute.xlu0 10
    %2231 = vperm.xlu0 %2230, %v1673
    %v2232 = vpop.permute.xlu0 %2231
    %v2234 = vlaneseq
    %v2235 = vshrl.u32 %v2234, 7
    %v2236 = vsub.s32 0, %v2235
    %v2237 = vrot.slane %v2232, %v2236
    %v2238 = vmul.f32 %v2213, %v1663
    %v2239 = vmul.f32 %v2221, %v1665
    %v2240 = vmul.f32 %v2229, %v1667
    %v2241 = vmul.f32 %v2237, %v1669
    %v2246 = vrot.slane %v2238, 2
    %v2247 = vrot.slane %v2239, 2
    %v2248 = vrot.slane %v2240, 2
    %v2249 = vrot.slane %v2241, 2
    %v2254 = vadd.f32 %v2202, %v2246
    %v2255 = vadd.f32 %v2203, %v2247
    %v2256 = vadd.f32 %v2204, %v2248
    %v2257 = vadd.f32 %v2205, %v2249
    %2258 = vset.pattern.permute.xlu0 11
    %2259 = vperm.xlu0 %2258, %v1670
    %v2260 = vpop.permute.xlu0 %2259
    %v2262 = vlaneseq
    %v2263 = vshrl.u32 %v2262, 7
    %v2264 = vsub.s32 0, %v2263
    %v2265 = vrot.slane %v2260, %v2264
    %2266 = vset.pattern.permute.xlu0 11
    %2267 = vperm.xlu0 %2266, %v1671
    %v2268 = vpop.permute.xlu0 %2267
    %v2270 = vlaneseq
    %v2271 = vshrl.u32 %v2270, 7
    %v2272 = vsub.s32 0, %v2271
    %v2273 = vrot.slane %v2268, %v2272
    %2274 = vset.pattern.permute.xlu0 11
    %2275 = vperm.xlu0 %2274, %v1672
    %v2276 = vpop.permute.xlu0 %2275
    %v2278 = vlaneseq
    %v2279 = vshrl.u32 %v2278, 7
    %v2280 = vsub.s32 0, %v2279
    %v2281 = vrot.slane %v2276, %v2280
    %2282 = vset.pattern.permute.xlu0 11
    %2283 = vperm.xlu0 %2282, %v1673
    %v2284 = vpop.permute.xlu0 %2283
    %v2286 = vlaneseq
    %v2287 = vshrl.u32 %v2286, 7
    %v2288 = vsub.s32 0, %v2287
    %v2289 = vrot.slane %v2284, %v2288
    %v2290 = vmul.f32 %v2265, %v1663
    %v2291 = vmul.f32 %v2273, %v1665
    %v2292 = vmul.f32 %v2281, %v1667
    %v2293 = vmul.f32 %v2289, %v1669
    %v2298 = vrot.slane %v2290, 3
    %v2299 = vrot.slane %v2291, 3
    %v2300 = vrot.slane %v2292, 3
    %v2301 = vrot.slane %v2293, 3
    %v2306 = vadd.f32 %v2254, %v2298
    %v2307 = vadd.f32 %v2255, %v2299
    %v2308 = vadd.f32 %v2256, %v2300
    %v2309 = vadd.f32 %v2257, %v2301
    %2310 = vset.pattern.permute.xlu0 12
    %2311 = vperm.xlu0 %2310, %v1670
    %v2312 = vpop.permute.xlu0 %2311
    %v2314 = vlaneseq
    %v2315 = vshrl.u32 %v2314, 7
    %v2316 = vsub.s32 0, %v2315
    %v2317 = vrot.slane %v2312, %v2316
    %2318 = vset.pattern.permute.xlu0 12
    %2319 = vperm.xlu0 %2318, %v1671
    %v2320 = vpop.permute.xlu0 %2319
    %v2322 = vlaneseq
    %v2323 = vshrl.u32 %v2322, 7
    %v2324 = vsub.s32 0, %v2323
    %v2325 = vrot.slane %v2320, %v2324
    %2326 = vset.pattern.permute.xlu0 12
    %2327 = vperm.xlu0 %2326, %v1672
    %v2328 = vpop.permute.xlu0 %2327
    %v2330 = vlaneseq
    %v2331 = vshrl.u32 %v2330, 7
    %v2332 = vsub.s32 0, %v2331
    %v2333 = vrot.slane %v2328, %v2332
    %2334 = vset.pattern.permute.xlu0 12
    %2335 = vperm.xlu0 %2334, %v1673
    %v2336 = vpop.permute.xlu0 %2335
    %v2338 = vlaneseq
    %v2339 = vshrl.u32 %v2338, 7
    %v2340 = vsub.s32 0, %v2339
    %v2341 = vrot.slane %v2336, %v2340
    %v2342 = vmul.f32 %v2317, %v1663
    %v2343 = vmul.f32 %v2325, %v1665
    %v2344 = vmul.f32 %v2333, %v1667
    %v2345 = vmul.f32 %v2341, %v1669
    %v2350 = vrot.slane %v2342, 4
    %v2351 = vrot.slane %v2343, 4
    %v2352 = vrot.slane %v2344, 4
    %v2353 = vrot.slane %v2345, 4
    %v2358 = vadd.f32 %v2306, %v2350
    %v2359 = vadd.f32 %v2307, %v2351
    %v2360 = vadd.f32 %v2308, %v2352
    %v2361 = vadd.f32 %v2309, %v2353
    %2362 = vset.pattern.permute.xlu0 13
    %2363 = vperm.xlu0 %2362, %v1670
    %v2364 = vpop.permute.xlu0 %2363
    %v2366 = vlaneseq
    %v2367 = vshrl.u32 %v2366, 7
    %v2368 = vsub.s32 0, %v2367
    %v2369 = vrot.slane %v2364, %v2368
    %2370 = vset.pattern.permute.xlu0 13
    %2371 = vperm.xlu0 %2370, %v1671
    %v2372 = vpop.permute.xlu0 %2371
    %v2374 = vlaneseq
    %v2375 = vshrl.u32 %v2374, 7
    %v2376 = vsub.s32 0, %v2375
    %v2377 = vrot.slane %v2372, %v2376
    %2378 = vset.pattern.permute.xlu0 13
    %2379 = vperm.xlu0 %2378, %v1672
    %v2380 = vpop.permute.xlu0 %2379
    %v2382 = vlaneseq
    %v2383 = vshrl.u32 %v2382, 7
    %v2384 = vsub.s32 0, %v2383
    %v2385 = vrot.slane %v2380, %v2384
    %2386 = vset.pattern.permute.xlu0 13
    %2387 = vperm.xlu0 %2386, %v1673
    %v2388 = vpop.permute.xlu0 %2387
    %v2390 = vlaneseq
    %v2391 = vshrl.u32 %v2390, 7
    %v2392 = vsub.s32 0, %v2391
    %v2393 = vrot.slane %v2388, %v2392
    %v2394 = vmul.f32 %v2369, %v1663
    %v2395 = vmul.f32 %v2377, %v1665
    %v2396 = vmul.f32 %v2385, %v1667
    %v2397 = vmul.f32 %v2393, %v1669
    %v2402 = vrot.slane %v2394, 5
    %v2403 = vrot.slane %v2395, 5
    %v2404 = vrot.slane %v2396, 5
    %v2405 = vrot.slane %v2397, 5
    %v2410 = vadd.f32 %v2358, %v2402
    %v2411 = vadd.f32 %v2359, %v2403
    %v2412 = vadd.f32 %v2360, %v2404
    %v2413 = vadd.f32 %v2361, %v2405
    %2414 = vset.pattern.permute.xlu0 14
    %2415 = vperm.xlu0 %2414, %v1670
    %v2416 = vpop.permute.xlu0 %2415
    %v2418 = vlaneseq
    %v2419 = vshrl.u32 %v2418, 7
    %v2420 = vsub.s32 0, %v2419
    %v2421 = vrot.slane %v2416, %v2420
    %2422 = vset.pattern.permute.xlu0 14
    %2423 = vperm.xlu0 %2422, %v1671
    %v2424 = vpop.permute.xlu0 %2423
    %v2426 = vlaneseq
    %v2427 = vshrl.u32 %v2426, 7
    %v2428 = vsub.s32 0, %v2427
    %v2429 = vrot.slane %v2424, %v2428
    %2430 = vset.pattern.permute.xlu0 14
    %2431 = vperm.xlu0 %2430, %v1672
    %v2432 = vpop.permute.xlu0 %2431
    %v2434 = vlaneseq
    %v2435 = vshrl.u32 %v2434, 7
    %v2436 = vsub.s32 0, %v2435
    %v2437 = vrot.slane %v2432, %v2436
    %2438 = vset.pattern.permute.xlu0 14
    %2439 = vperm.xlu0 %2438, %v1673
    %v2440 = vpop.permute.xlu0 %2439
    %v2442 = vlaneseq
    %v2443 = vshrl.u32 %v2442, 7
    %v2444 = vsub.s32 0, %v2443
    %v2445 = vrot.slane %v2440, %v2444
    %v2446 = vmul.f32 %v2421, %v1663
    %v2447 = vmul.f32 %v2429, %v1665
    %v2448 = vmul.f32 %v2437, %v1667
    %v2449 = vmul.f32 %v2445, %v1669
    %v2454 = vrot.slane %v2446, 6
    %v2455 = vrot.slane %v2447, 6
    %v2456 = vrot.slane %v2448, 6
    %v2457 = vrot.slane %v2449, 6
    %v2462 = vadd.f32 %v2410, %v2454
    %v2463 = vadd.f32 %v2411, %v2455
    %v2464 = vadd.f32 %v2412, %v2456
    %v2465 = vadd.f32 %v2413, %v2457
    %2466 = vset.pattern.permute.xlu0 15
    %2467 = vperm.xlu0 %2466, %v1670
    %v2468 = vpop.permute.xlu0 %2467
    %v2470 = vlaneseq
    %v2471 = vshrl.u32 %v2470, 7
    %v2472 = vsub.s32 0, %v2471
    %v2473 = vrot.slane %v2468, %v2472
    %2474 = vset.pattern.permute.xlu0 15
    %2475 = vperm.xlu0 %2474, %v1671
    %v2476 = vpop.permute.xlu0 %2475
    %v2478 = vlaneseq
    %v2479 = vshrl.u32 %v2478, 7
    %v2480 = vsub.s32 0, %v2479
    %v2481 = vrot.slane %v2476, %v2480
    %2482 = vset.pattern.permute.xlu0 15
    %2483 = vperm.xlu0 %2482, %v1672
    %v2484 = vpop.permute.xlu0 %2483
    %v2486 = vlaneseq
    %v2487 = vshrl.u32 %v2486, 7
    %v2488 = vsub.s32 0, %v2487
    %v2489 = vrot.slane %v2484, %v2488
    %2490 = vset.pattern.permute.xlu0 15
    %2491 = vperm.xlu0 %2490, %v1673
    %v2492 = vpop.permute.xlu0 %2491
    %v2494 = vlaneseq
    %v2495 = vshrl.u32 %v2494, 7
    %v2496 = vsub.s32 0, %v2495
    %v2497 = vrot.slane %v2492, %v2496
    %v2498 = vmul.f32 %v2473, %v1663
    %v2499 = vmul.f32 %v2481, %v1665
    %v2500 = vmul.f32 %v2489, %v1667
    %v2501 = vmul.f32 %v2497, %v1669
    %v2506 = vrot.slane %v2498, 7
    %v2507 = vrot.slane %v2499, 7
    %v2508 = vrot.slane %v2500, 7
    %v2509 = vrot.slane %v2501, 7
    %v2514 = vadd.f32 %v2462, %v2506
    %v2515 = vadd.f32 %v2463, %v2507
    %v2516 = vadd.f32 %v2464, %v2508
    %v2517 = vadd.f32 %v2465, %v2509
    %2518 = vst [vmem:[#allocation2] sm:$0x1] %v2514
    %2519 = vst [vmem:[#allocation2 + $0x1] sm:$0x1] %v2515
    %2520 = vst [vmem:[#allocation2 + $0x2] sm:$0x1] %v2516
    %2521 = vst [vmem:[#allocation2 + $0x3] sm:$0x1] %v2517
    // Predicated region
    $region18: #{tpu_custom_call.1} parent=1 // pred_check
      _
    $region19: #{tpu_custom_call.1} parent=1 // pred_check_branch
      %2523 = sbr.rel (0) target = $region21
    $region20: #{tpu_custom_call.1} parent=1 // pred_region
      %s2525 = ssub.s32 64, 64
      %2526 = vsyncadd [#allocation3], %s2525
      %s2527 = sshll.u32 [#allocation2], 4
      %s2528 = int_to_ptr.vmem [resolvable:$true] %s2527
      %2533 = dma.vmem_to_hbm [thread:$0]  %s2528, 64, %s4, [#allocation3], 16, 16, 1
    $region21: #{tpu_custom_call.1} parent=1 // pred_fallthru
      _
    // Predicated region
    $region22: #{tpu_custom_call.1} parent=1 // pred_check
      _
    $region23: #{tpu_custom_call.1} parent=1 // pred_check_branch
      %2535 = sbr.rel (0) target = $region25
    $region24: #{tpu_custom_call.1} parent=1 // pred_region
      %2536 = dma.done [#allocation3], 64
    $region25: #{tpu_custom_call.1} parent=1 // pred_fallthru
      _
    %2537 = vsyncpa [#allocation3], 1

</llo_original>
